<compile_context>
chip_gen: v7x
topology: tpu7x:2x2x1
jax: 0.10.0
libtpu: 0.0.40
codegen_flags: <defaults>
</compile_context>

<pallas_src>
import functools
import math

import numpy as np
import jax
import jax.numpy as jnp
from jax.experimental import pallas as pl
from jax.experimental.pallas import tpu as pltpu


def _round_up(v, m):
    return ((v + m - 1) // m) * m


def _pick_tile(total, want, align):
    """Largest t <= want with t % align == 0 and total % t == 0."""
    t = min(want, total)
    t = max((t // align) * align, align)
    while t > align:
        if total % t == 0:
            return t
        t -= align
    return align if total % align == 0 else total


def _vmem_capacity_bytes():
    try:
        return int(pltpu.get_tpu_info().vmem_capacity_bytes)
    except Exception:
        return 64 << 20          # conservative fallback (v7x per-TensorCore VMEM)


def _gcnii_kernel(ids_ref, cnt_ref,              # scalar prefetch (SMEM)
                  a_ref, x_ref, side_ref, w_ref,  # inputs (VMEM)
                  o_ref,                          # output
                  acc_ref,                        # scratch
                  *, alpha, tk, mb, resident_x):
    # a_ref   : (tm, tk)  bf16 adjacency tile (k-th non-empty column block of row block i)
    # x_ref   : (Np, Cp) resident, or (tk, Cp) streamed, bf16 features
    # side_ref: (tm, Cp)  f32   alpha*(x0@W_eff) + beta*b (+ x)
    # w_ref   : (Cp, Cp)  bf16  folded weight  beta*W.T + (1-beta)*I (zero-padded)
    i = pl.program_id(0)
    k = pl.program_id(1)
    nk = pl.num_programs(1)

    @pl.when(k == 0)
    def _():
        acc_ref[...] = jnp.zeros_like(acc_ref)

    # Block-sparse spmm: only non-empty adjacency blocks contribute.
    @pl.when(k < cnt_ref[i])
    def _():
        if resident_x:
            blk = ids_ref[i * mb + k]
            off = pl.multiple_of(blk * tk, 128)
            xt = x_ref[pl.ds(off, tk), :]
        else:
            xt = x_ref[...]
        acc_ref[...] += jnp.dot(a_ref[...], xt,
                                preferred_element_type=jnp.float32)

    @pl.when(k == nk - 1)
    def _():
        core = jnp.dot(acc_ref[...].astype(jnp.bfloat16), w_ref[...],
                       preferred_element_type=jnp.float32)
        o_ref[...] = ((1.0 - alpha) * core + side_ref[...]).astype(o_ref.dtype)


def gcnii_forward(adj, x, init_x, weight, bias, *,
                  alpha=0.1, beta=1.0, residual=False,
                  tm=256, tk=512, stream_dtype=jnp.bfloat16, resident_x=None):
    N, C = x.shape
    assert adj.shape == (N, N)
    f32 = jnp.float32
    out_dtype = x.dtype

    # --- pad to TPU-friendly shapes ----------------------------------------
    Np = _round_up(N, 128)
    Cp = _round_up(C, 128)                 # lane-dense (>=128 wide) stores
    tm = _pick_tile(Np, tm, 16)            # 16 = bf16 sublane-pack granularity
    if Np // tm < 2 and Np >= 256:         # keep >=2 row blocks for megacore
        tm = _pick_tile(Np, Np // 2, 16)
    tk = _pick_tile(Np, tk, 128)
    n_i, n_k = Np // tm, Np // tk

    # --- dominant streams in bf16 (no padded f32 adjacency copy) -----------
    adj_s = jnp.pad(adj.astype(stream_dtype), ((0, Np - N), (0, Np - N)))
    x_s = jnp.pad(x.astype(stream_dtype), ((0, Np - N), (0, Cp - C)))
    # TODO(synk): stream adj as fp8 (v7x) / int8 (v5e-v6e) with a per-row-block
    # scale folded into the epilogue once accuracy on the normalized edge
    # weights is validated.

    # --- fold everything but the spmm into W_eff + one side stream ---------
    #   h = (1-alpha)*(A@x)@W_eff + alpha*(x0@W_eff) + beta*b (+ x)
    w_eff = beta * weight.astype(f32).T + (1.0 - beta) * jnp.eye(C, dtype=f32)
    side = alpha * (init_x.astype(f32) @ w_eff) + beta * bias.astype(f32)[None, :]
    if residual:
        side = side + x.astype(f32)
    side_p = jnp.pad(side, ((0, Np - N), (0, Cp - C)))
    w_p = jnp.pad(w_eff, ((0, Cp - C), (0, Cp - C))).astype(jnp.bfloat16)

    # --- block-sparse structure: reduce on device, tiny mask to host -------
    # TODO(synk): for a true sparse (COO/CSR) graph build this table from the
    # edge list instead of a dense block-any reduction.
    mask = np.asarray((adj_s != 0).reshape(n_i, tm, n_k, tk).any(axis=(1, 3)))
    counts = mask.sum(axis=1).astype(np.int32)
    mb = max(int(counts.max()), 1)
    ids = np.zeros((n_i, mb), dtype=np.int32)
    for ii in range(n_i):
        nz = np.nonzero(mask[ii])[0].astype(np.int32)
        if nz.size == 0:
            nz = np.zeros((1,), dtype=np.int32)
        ids[ii, :nz.size] = nz
        ids[ii, nz.size:] = nz[-1]         # repeat last index -> no extra DMA
    blk_ids = jnp.asarray(ids.reshape(-1))  # flat 1-D (cheap SMEM layout)
    blk_cnt = jnp.asarray(counts)
    # TODO(synk): a flat 1-D grid over the total nonzero blocks (CSR row
    # pointers) would remove the (mb - cnt[i]) dead steps on hub-heavy graphs,
    # at the cost of the "parallel" row axis.

    # --- generation-aware VMEM budget ---------------------------------------
    sd = jnp.dtype(stream_dtype).itemsize
    od = jnp.dtype(out_dtype).itemsize
    cap = _vmem_capacity_bytes()
    base = (2 * tm * tk * sd          # adjacency double buffer
            + 2 * tm * Cp * 4         # side double buffer
            + 2 * tm * Cp * od        # output double buffer
            + tm * Cp * 4             # f32 accumulator
            + 2 * Cp * Cp * 2)        # W_eff (constant index, 2 bufs)
    x_resident_bytes = 2 * Np * Cp * sd
    x_stream_bytes = 2 * tk * Cp * sd
    if resident_x is None:
        resident_x = (x_resident_bytes <= max(cap // 4, 8 << 20)
                      and base + x_resident_bytes <= int(0.6 * cap))
    total = base + (x_resident_bytes if resident_x else x_stream_bytes)
    vmem_limit = int(min(max(2 * total, 32 << 20), int(0.8 * cap)))
    vmem_limit = max(vmem_limit, total + (4 << 20))

    if resident_x:
        x_spec = pl.BlockSpec((Np, Cp), lambda i, k, ids, cnt: (0, 0))
    else:
        x_spec = pl.BlockSpec((tk, Cp), lambda i, k, ids, cnt: (ids[i * mb + k], 0))
    # NOTE: on VMEM-tight configs (large Cp on v7x), pipeline_mode=pl.Buffered(1)
    # on the constant-index W_eff / resident-x specs frees their second buffer.

    kernel = functools.partial(_gcnii_kernel, alpha=float(alpha),
                               tk=tk, mb=mb, resident_x=bool(resident_x))

    out = pl.pallas_call(
        kernel,
        out_shape=jax.ShapeDtypeStruct((Np, Cp), out_dtype),
        grid_spec=pltpu.PrefetchScalarGridSpec(
            num_scalar_prefetch=2,
            grid=(n_i, mb),
            in_specs=[
                pl.BlockSpec((tm, tk), lambda i, k, ids, cnt: (i, ids[i * mb + k])),
                x_spec,
                pl.BlockSpec((tm, Cp), lambda i, k, ids, cnt: (i, 0)),   # side
                pl.BlockSpec((Cp, Cp), lambda i, k, ids, cnt: (0, 0)),   # W_eff
            ],
            out_specs=pl.BlockSpec((tm, Cp), lambda i, k, ids, cnt: (i, 0)),
            scratch_shapes=[pltpu.VMEM((tm, Cp), jnp.float32)],
        ),
        compiler_params=pltpu.CompilerParams(
            dimension_semantics=("parallel", "arbitrary"),
            vmem_limit_bytes=vmem_limit),
    )(blk_ids, blk_cnt, adj_s, x_s, side_p, w_p)

    return out[:N, :C]


def gcnii_reference(adj, x, init_x, weight, bias, *, alpha, beta, residual,
                    match_kernel=False):
    f32 = jnp.float32
    b_row = jnp.reshape(bias.astype(f32), (1, -1))
    if match_kernel:
        bf = jnp.bfloat16
        w_eff = beta * weight.astype(f32).T + (1.0 - beta) * jnp.eye(x.shape[1], dtype=f32)
        s = adj.astype(bf).astype(f32) @ x.astype(bf).astype(f32)
        core = s.astype(bf).astype(f32) @ w_eff.astype(bf).astype(f32)
        h = (1.0 - alpha) * core + alpha * (init_x.astype(f32) @ w_eff) + beta * b_row
    else:
        hidden = adj @ x
        hidden = (1.0 - alpha) * hidden + alpha * init_x
        h = beta * (hidden @ weight.T + b_row) + (1.0 - beta) * hidden
    if residual:
        h = h + x
    return h


if __name__ == "__main__":
    N, C = 1000, 48                # nodes (padded to 1024), channels (padded to 128)
    alpha, beta, residual = 0.1, 0.5, True

    key = jax.random.PRNGKey(0)
    k_adj, k_x, k_x0, k_w, k_b = jax.random.split(key, 5)

    # Banded random graph -> symmetric, self-looped, symmetrically normalized.
    # (Banded structure leaves several adjacency blocks empty so the
    # block-sparse skip path is actually exercised.)
    idx = jnp.arange(N)
    band = jnp.abs(idx[:, None] - idx[None, :]) <= 24
    rnd = jax.random.uniform(k_adj, (N, N)) < 0.35
    raw = (band & rnd).astype(jnp.float32)
    adj01 = jnp.clip(raw + raw.T + jnp.eye(N, dtype=jnp.float32), 0.0, 1.0)
    d_inv_sqrt = 1.0 / jnp.sqrt(adj01.sum(axis=1))
    adj = adj01 * d_inv_sqrt[:, None] * d_inv_sqrt[None, :]

    x = jax.random.normal(k_x, (N, C), dtype=jnp.float32)
    init_x = jax.random.normal(k_x0, (N, C), dtype=jnp.float32)

    # nn.Linear(C, C) with GCNII reset_parameters: U(-1/sqrt(C), 1/sqrt(C)).
    stdv = 1.0 / math.sqrt(C)
    weight = jax.random.uniform(k_w, (C, C), minval=-stdv, maxval=stdv, dtype=jnp.float32)
    bias = jax.random.uniform(k_b, (C,), minval=-stdv, maxval=stdv, dtype=jnp.float32)

    out = gcnii_forward(adj, x, init_x, weight, bias,
                        alpha=alpha, beta=beta, residual=residual)
    out = jax.block_until_ready(out)
    assert out.shape == (N, C)

    # Reference matched to the bf16-streamed spmm / bf16 epilogue (tight) ...
    ref_match = gcnii_reference(adj, x, init_x, weight, bias,
                                alpha=alpha, beta=beta, residual=residual,
                                match_kernel=True)
    # ... and the pure-f32 PyTorch-equivalent reference (looser tolerance).
    ref_f32 = gcnii_reference(adj, x, init_x, weight, bias,
                              alpha=alpha, beta=beta, residual=residual)
    assert jnp.allclose(out, ref_match, atol=5e-3, rtol=5e-3), "mismatch vs bf16-matched reference"
    assert jnp.allclose(out, ref_f32, atol=5e-2, rtol=5e-2), "mismatch vs f32 reference"

    print("KERNEL_OK")
</pallas_src>

<mosaic_0001>
module attributes {stable_mosaic.version = 11 : i64} {
  func.func @_gcnii_kernel(%arg0: i32, %arg1: i32, %arg2: memref<8xi32, #tpu.memory_space<smem>>, %arg3: memref<4xi32, #tpu.memory_space<smem>>, %arg4: memref<256x512xbf16, #tpu.memory_space<vmem>>, %arg5: memref<1024x128xbf16, #tpu.memory_space<vmem>>, %arg6: memref<256x128xf32, #tpu.memory_space<vmem>>, %arg7: memref<128x128xbf16, #tpu.memory_space<vmem>>, %arg8: memref<256x128xf32, #tpu.memory_space<vmem>>, %arg9: memref<256x128xf32, #tpu.memory_space<vmem>>) attributes {dimension_semantics = [#tpu.dimension_semantics<parallel>, #tpu.dimension_semantics<arbitrary>], iteration_bounds = array<i64: 4, 2>, scalar_prefetch = 2 : i64, scratch_operands = 1 : i64, tpu.core_type = #tpu.core_type<tc>, window_params = [{transform_indices = @transform_0, window_bounds = array<i64: 256, 512>}, {pipeline_mode = #tpu.pipeline_mode<synchronous>, transform_indices = @transform_1, window_bounds = array<i64: 1024, 128>}, {transform_indices = @transform_2, window_bounds = array<i64: 256, 128>}, {pipeline_mode = #tpu.pipeline_mode<synchronous>, transform_indices = @transform_3, window_bounds = array<i64: 128, 128>}, {transform_indices = @transform_4, window_bounds = array<i64: 256, 128>}]} {
    %c0_i32 = arith.constant 0 : i32
    %0 = arith.cmpi eq, %arg1, %c0_i32 : i32
    %1 = arith.extui %0 : i1 to i32
    %c0_i32_0 = arith.constant 0 : i32
    %2 = arith.cmpi ne, %1, %c0_i32_0 : i32
    scf.if %2 {
      %cst = arith.constant 0.000000e+00 : f32
      %11 = vector.broadcast %cst : f32 to vector<256x128xf32>
      %c0 = arith.constant 0 : index
      %c0_3 = arith.constant 0 : index
      %12 = vector.load %arg9[%c0, %c0_3] : memref<256x128xf32, #tpu.memory_space<vmem>>, vector<256x128xf32>
      tpu.vector_store %arg9[%c0, %c0_3], %11 {strides = array<i32>} : memref<256x128xf32, #tpu.memory_space<vmem>>, vector<256x128xf32>,
    } else {
    }
    %3 = arith.index_cast %arg0 : i32 to index
    %4 = memref.load %arg3[%3] : memref<4xi32, #tpu.memory_space<smem>>
    %5 = arith.cmpi slt, %arg1, %4 : i32
    %6 = arith.extui %5 : i1 to i32
    %c0_i32_1 = arith.constant 0 : i32
    %7 = arith.cmpi ne, %6, %c0_i32_1 : i32
    scf.if %7 {
      %c2_i32 = arith.constant 2 : i32
      %11 = arith.muli %arg0, %c2_i32 : i32
      %12 = arith.addi %11, %arg1 : i32
      %13 = arith.index_cast %12 : i32 to index
      %14 = memref.load %arg2[%13] : memref<8xi32, #tpu.memory_space<smem>>
      %c512_i32 = arith.constant 512 : i32
      %15 = arith.muli %14, %c512_i32 : i32
      %16 = tpu.assume_multiple %15, 128 : i32
      %17 = arith.index_cast %16 : i32 to index
      %c0 = arith.constant 0 : index
      %18 = vector.load %arg5[%17, %c0] : memref<1024x128xbf16, #tpu.memory_space<vmem>>, vector<512x128xbf16>
      %c0_3 = arith.constant 0 : index
      %c0_4 = arith.constant 0 : index
      %19 = vector.load %arg9[%c0_3, %c0_4] : memref<256x128xf32, #tpu.memory_space<vmem>>, vector<256x128xf32>
      %c0_5 = arith.constant 0 : index
      %c0_6 = arith.constant 0 : index
      %20 = vector.load %arg4[%c0_5, %c0_6] : memref<256x512xbf16, #tpu.memory_space<vmem>>, vector<256x512xbf16>
      %cst = arith.constant dense<0.000000e+00> : vector<256x128xf32>
      %21 = tpu.matmul %20, %18, %cst {dimension_numbers = #tpu.dot_dimension_numbers<[1], [0], [0], [1], [0, 0, 1, 1], [], []>} : vector<256x512xbf16>, vector<512x128xbf16>, vector<256x128xf32> -> vector<256x128xf32>
      %22 = arith.addf %19, %21 : vector<256x128xf32>
      %c0_7 = arith.constant 0 : index
      %c0_8 = arith.constant 0 : index
      %23 = vector.load %arg9[%c0_7, %c0_8] : memref<256x128xf32, #tpu.memory_space<vmem>>, vector<256x128xf32>
      tpu.vector_store %arg9[%c0_7, %c0_8], %22 {strides = array<i32>} : memref<256x128xf32, #tpu.memory_space<vmem>>, vector<256x128xf32>,
    } else {
    }
    %c1_i32 = arith.constant 1 : i32
    %8 = arith.cmpi eq, %arg1, %c1_i32 : i32
    %9 = arith.extui %8 : i1 to i32
    %c0_i32_2 = arith.constant 0 : i32
    %10 = arith.cmpi ne, %9, %c0_i32_2 : i32
    scf.if %10 {
      %c0 = arith.constant 0 : index
      %c0_3 = arith.constant 0 : index
      %11 = vector.load %arg9[%c0, %c0_3] : memref<256x128xf32, #tpu.memory_space<vmem>>, vector<256x128xf32>
      %12 = arith.truncf %11 : vector<256x128xf32> to vector<256x128xbf16>
      %c0_4 = arith.constant 0 : index
      %c0_5 = arith.constant 0 : index
      %13 = vector.load %arg7[%c0_4, %c0_5] : memref<128x128xbf16, #tpu.memory_space<vmem>>, vector<128x128xbf16>
      %cst = arith.constant dense<0.000000e+00> : vector<256x128xf32>
      %14 = tpu.matmul %12, %13, %cst {dimension_numbers = #tpu.dot_dimension_numbers<[1], [0], [0], [1], [0, 0, 1, 1], [], []>} : vector<256x128xbf16>, vector<128x128xbf16>, vector<256x128xf32> -> vector<256x128xf32>
      %cst_6 = arith.constant 0.899999976 : f32
      %15 = vector.broadcast %cst_6 : f32 to vector<256x128xf32>
      %16 = arith.mulf %15, %14 : vector<256x128xf32>
      %c0_7 = arith.constant 0 : index
      %c0_8 = arith.constant 0 : index
      %17 = vector.load %arg6[%c0_7, %c0_8] : memref<256x128xf32, #tpu.memory_space<vmem>>, vector<256x128xf32>
      %18 = arith.addf %16, %17 : vector<256x128xf32>
      %c0_9 = arith.constant 0 : index
      %c0_10 = arith.constant 0 : index
      %19 = vector.load %arg8[%c0_9, %c0_10] : memref<256x128xf32, #tpu.memory_space<vmem>>, vector<256x128xf32>
      tpu.vector_store %arg8[%c0_9, %c0_10], %18 {strides = array<i32>} : memref<256x128xf32, #tpu.memory_space<vmem>>, vector<256x128xf32>,
    } else {
    }
    return
  }
  func.func @transform_0(%arg0: i32, %arg1: i32, %arg2: memref<8xi32, #tpu.memory_space<smem>>, %arg3: memref<4xi32, #tpu.memory_space<smem>>) -> (i32, i32) {
    %c2_i32 = arith.constant 2 : i32
    %0 = arith.muli %arg0, %c2_i32 : i32
    %1 = arith.addi %0, %arg1 : i32
    %2 = arith.index_cast %1 : i32 to index
    %3 = memref.load %arg2[%2] : memref<8xi32, #tpu.memory_space<smem>>
    %c0_i32 = arith.constant 0 : i32
    return %arg0, %3 : i32, i32
  }
  func.func @transform_1(%arg0: i32, %arg1: i32, %arg2: memref<8xi32, #tpu.memory_space<smem>>, %arg3: memref<4xi32, #tpu.memory_space<smem>>) -> (i32, i32) {
    %c0_i32 = arith.constant 0 : i32
    %c0_i32_0 = arith.constant 0 : i32
    %c0_i32_1 = arith.constant 0 : i32
    return %c0_i32, %c0_i32_0 : i32, i32
  }
  func.func @transform_2(%arg0: i32, %arg1: i32, %arg2: memref<8xi32, #tpu.memory_space<smem>>, %arg3: memref<4xi32, #tpu.memory_space<smem>>) -> (i32, i32) {
    %c0_i32 = arith.constant 0 : i32
    %c0_i32_0 = arith.constant 0 : i32
    return %arg0, %c0_i32 : i32, i32
  }
  func.func @transform_3(%arg0: i32, %arg1: i32, %arg2: memref<8xi32, #tpu.memory_space<smem>>, %arg3: memref<4xi32, #tpu.memory_space<smem>>) -> (i32, i32) {
    %c0_i32 = arith.constant 0 : i32
    %c0_i32_0 = arith.constant 0 : i32
    %c0_i32_1 = arith.constant 0 : i32
    return %c0_i32, %c0_i32_0 : i32, i32
  }
  func.func @transform_4(%arg0: i32, %arg1: i32, %arg2: memref<8xi32, #tpu.memory_space<smem>>, %arg3: memref<4xi32, #tpu.memory_space<smem>>) -> (i32, i32) {
    %c0_i32 = arith.constant 0 : i32
    %c0_i32_0 = arith.constant 0 : i32
    return %arg0, %c0_i32 : i32, i32
  }
}

</mosaic_0001>

<llo_original>
// kernel: tpu_custom_call.1
$region0: #{tpu_custom_call.1}
  #allocation0 [shape = 'u32[]', space=smem, size = 0x4, offset = 0x4, fixed_abs, tag = 'smem constant byte address 0x4 - core index']
  #allocation1 [shape = 'u32[144,128]{1,0:T(1,128)}', space=vmem, size = 0x12000, scoped, tag = 'internal scratch']
  #allocation2 [shape = 'f32[256,128]{1,0:T(8,128)}', space=vmem, size = 0x20000, scoped, tag = 'scratch operand']
  #allocation3 [shape = 's32[1]{0}', space=sflag, size = 0x4, scoped, tag = 'scoped memory for tpu_custom_call.1']
  #allocation4 [shape = 'u8[512]{0}', space=smem, size = 0x200, scoped, tag = 'prefetched SMEM operand 0']
  #allocation5 [shape = 'u8[512]{0}', space=smem, size = 0x200, scoped, tag = 'prefetched SMEM operand 1']
  %s0 = inlined_call_operand.hbm [shape: s32[8], index: 0, kind: input, shape index: {}]
  %s1 = inlined_call_operand.hbm [shape: s32[4], index: 1, kind: input, shape index: {}]
  %s2 = inlined_call_operand.hbm [shape: bf16[1024,1024], index: 2, kind: input, shape index: {}]
  %s3 = inlined_call_operand.hbm [shape: bf16[1024,128], index: 3, kind: input, shape index: {}]
  %s4 = inlined_call_operand.hbm [shape: f32[1024,128], index: 4, kind: input, shape index: {}]
  %s5 = inlined_call_operand.hbm [shape: bf16[128,128], index: 5, kind: input, shape index: {}]
  %s6 = inlined_call_operand.hbm [shape: f32[1024,128], index: 6, kind: output, shape index: {}]
  %s7 = sld [smem:[#allocation0]]
  $region77: #{tpu_custom_call.1} parent=0
    _
  %s9 = ssub.s32 1, %s7
  %s10 = scalar_select 0, %s9, %s7
  %12 = dma.hbm_to_smem %s0, 16, [#allocation4], [#allocation3]
  %14 = dma.hbm_to_smem %s1, 16, [#allocation5], [#allocation3]
  %15 = dma.done [#allocation3], 32
  %16 = sfence
  $region1: #{tpu_custom_call.1} parent=0
    #allocation6 [shape = 'u8[524288]{0}', space=vmem, size = 0x80000, scoped, tag = 'input window, operand 2']
    #allocation7 [shape = 's32[2]{0}', space=sflag, size = 0x8, scoped, tag = 'scoped memory for tpu_custom_call.1']
    #allocation8 [shape = 's32[2]{0}', space=sflag, size = 0x8, scoped, tag = 'scoped memory for tpu_custom_call.1']
    #allocation9 [shape = 'u8[262144]{0}', space=vmem, size = 0x40000, scoped, tag = 'input window, operand 3, single buffered']
    #allocation10 [shape = 's32[1]{0}', space=sflag, size = 0x4, scoped, tag = 'scoped memory for tpu_custom_call.1']
    #allocation11 [shape = 'u8[262144]{0}', space=vmem, size = 0x40000, scoped, tag = 'input window, operand 4']
    #allocation12 [shape = 'u8[32768]{0}', space=vmem, size = 0x8000, scoped, tag = 'input window, operand 5, single buffered']
    #allocation13 [shape = 'u8[262144]{0}', space=vmem, size = 0x40000, scoped, tag = 'output window, operand 0']
    %17 = vsyncpa [#allocation7], 0
    %s18 = scalar_lea.sflag [#allocation7], 1
    %19 = vsyncpa %s18, 0
    %20 = vsyncpa [#allocation10], 0
    %21 = vsyncpa [#allocation8], 0
    %s22 = scalar_lea.sflag [#allocation8], 1
    %23 = vsyncpa %s22, 0
    loop: start=0, step=1, limit=10
    $region2: #{tpu_custom_call.1} parent=1 // loop_pre_header
      _
    $region3: #{tpu_custom_call.1} parent=1 // loop_header
      %s25 = sphi 0, %s29
      %p26 = scmp.ge.s32.totalorder %s25, 10
      %s32 = sphi 0, %s44
      %s33 = sphi 0, %s40
      %s34 = sphi 0, %s32
      %s35 = sphi 0, %s33
      %s36 = sphi 0, %s34
      %s37 = sphi 0, %s35
      %s55 = sphi 0, %s57
      %s58 = sphi 0, %s55
      %s59 = sphi 0, %s58
      %s75 = sphi 0, %s59
      %s79 = sphi 0, %s79
      %s81 = sphi 0, %s79
      %s82 = sphi 0, %s81
      %s96 = sphi 0, %s82
      %s102 = sphi 0, %s104
      %s105 = sphi 0, %s102
      %s106 = sphi 0, %s105
      %s122 = sphi 0, %s106
      %s126 = sphi 0, %s126
      %s128 = sphi 0, %s126
      %s129 = sphi 0, %s128
      %s143 = sphi 0, %s129
      %s149 = sphi 0, %s151
      %s152 = sphi 0, %s149
      %s153 = sphi 0, %s152
      %s169 = sphi 0, %s153
    $region4: #{tpu_custom_call.1} parent=1 // loop_header_branch
      %28 = sbr.rel (%p26) target = $region8
    $region5: #{tpu_custom_call.1} parent=1 // loop_body
      %s30 = ssub.s32 %s25, 1
      %s31 = ssub.s32 %s25, 2
      %s38 = sadd.s32 1, %s33
      %p39 = scmp.ge.s32.totalorder %s38, 2
      %s40 = scalar_select %p39, 0, %s38
      %s41 = sadd.s32 1, %s32
      %s42 = scalar_select %p39, %s41, %s32
      %p43 = scmp.ge.s32.totalorder %s42, 4
      %s44 = scalar_select %p43, 0, %s42
      %s45 = smul.u32 %s32, 2
      %s46 = sadd.s32 %s45, %s33
      %s47 = sld [smem:[#allocation4 + %s46]]
      %s48 = smul.u32 %s44, 2
      %s49 = sadd.s32 %s48, %s40
      %s50 = sld [smem:[#allocation4 + %s49]]
      %s51 = ssub.s32 %s32, %s44
      %s52 = ssub.s32 %s47, %s50
      %s53 = sor.u32 %s51, %s52
      %p54 = scmp.eq.s32.totalorder %s53, 0
      %s56 = sadd.s32 %s55, 1
      %s57 = scalar_select %p54, %s55, %s56
      %p60 = pneg %p54
      %p61 = scmp.eq.s32.totalorder %s25, 7
      %p62 = por %p60, %p61
      %p63 = scmp.ne.s32.totalorder %s55, %s58
      %p64 = scmp.eq.s32.totalorder %s25, 0
      %p65 = por %p63, %p64
      %p66 = scmp.ne.s32.totalorder %s55, %s58
      %p67 = scmp.eq.s32.totalorder %s30, 7
      %p68 = por %p66, %p67
      %p69 = scmp.ne.s32.totalorder %s58, %s59
      %p70 = scmp.eq.s32.totalorder %s30, 0
      %p71 = por %p69, %p70
      %p72 = scmp.ne.s32.totalorder %s58, %s59
      %p73 = scmp.eq.s32.totalorder %s31, 7
      %p74 = por %p72, %p73
      %p76 = scmp.ne.s32.totalorder %s59, %s75
      %p77 = scmp.eq.s32.totalorder %s31, 0
      %p78 = por %p76, %p77
      %s80 = sadd.s32 %s79, 1
      %p83 = scmp.eq.s32.totalorder %s25, 7
      %p84 = scmp.ne.s32.totalorder %s79, %s81
      %p85 = scmp.eq.s32.totalorder %s25, 0
      %p86 = por %p84, %p85
      %p87 = scmp.ne.s32.totalorder %s79, %s81
      %p88 = scmp.eq.s32.totalorder %s30, 7
      %p89 = por %p87, %p88
      %p90 = scmp.ne.s32.totalorder %s81, %s82
      %p91 = scmp.eq.s32.totalorder %s30, 0
      %p92 = por %p90, %p91
      %p93 = scmp.ne.s32.totalorder %s81, %s82
      %p94 = scmp.eq.s32.totalorder %s31, 7
      %p95 = por %p93, %p94
      %p97 = scmp.ne.s32.totalorder %s82, %s96
      %p98 = scmp.eq.s32.totalorder %s31, 0
      %p99 = por %p97, %p98
      %s100 = ssub.s32 %s32, %s44
      %p101 = scmp.eq.s32.totalorder %s100, 0
      %s103 = sadd.s32 %s102, 1
      %s104 = scalar_select %p101, %s102, %s103
      %p107 = pneg %p101
      %p108 = scmp.eq.s32.totalorder %s25, 7
      %p109 = por %p107, %p108
      %p110 = scmp.ne.s32.totalorder %s102, %s105
      %p111 = scmp.eq.s32.totalorder %s25, 0
      %p112 = por %p110, %p111
      %p113 = scmp.ne.s32.totalorder %s102, %s105
      %p114 = scmp.eq.s32.totalorder %s30, 7
      %p115 = por %p113, %p114
      %p116 = scmp.ne.s32.totalorder %s105, %s106
      %p117 = scmp.eq.s32.totalorder %s30, 0
      %p118 = por %p116, %p117
      %p119 = scmp.ne.s32.totalorder %s105, %s106
      %p120 = scmp.eq.s32.totalorder %s31, 7
      %p121 = por %p119, %p120
      %p123 = scmp.ne.s32.totalorder %s106, %s122
      %p124 = scmp.eq.s32.totalorder %s31, 0
      %p125 = por %p123, %p124
      %s127 = sadd.s32 %s126, 1
      %p130 = scmp.eq.s32.totalorder %s25, 7
      %p131 = scmp.ne.s32.totalorder %s126, %s128
      %p132 = scmp.eq.s32.totalorder %s25, 0
      %p133 = por %p131, %p132
      %p134 = scmp.ne.s32.totalorder %s126, %s128
      %p135 = scmp.eq.s32.totalorder %s30, 7
      %p136 = por %p134, %p135
      %p137 = scmp.ne.s32.totalorder %s128, %s129
      %p138 = scmp.eq.s32.totalorder %s30, 0
      %p139 = por %p137, %p138
      %p140 = scmp.ne.s32.totalorder %s128, %s129
      %p141 = scmp.eq.s32.totalorder %s31, 7
      %p142 = por %p140, %p141
      %p144 = scmp.ne.s32.totalorder %s129, %s143
      %p145 = scmp.eq.s32.totalorder %s31, 0
      %p146 = por %p144, %p145
      %s147 = ssub.s32 %s32, %s44
      %p148 = scmp.eq.s32.totalorder %s147, 0
      %s150 = sadd.s32 %s149, 1
      %s151 = scalar_select %p148, %s149, %s150
      %p154 = pneg %p148
      %p155 = scmp.eq.s32.totalorder %s25, 7
      %p156 = por %p154, %p155
      %p157 = scmp.ne.s32.totalorder %s149, %s152
      %p158 = scmp.eq.s32.totalorder %s25, 0
      %p159 = por %p157, %p158
      %p160 = scmp.ne.s32.totalorder %s149, %s152
      %p161 = scmp.eq.s32.totalorder %s30, 7
      %p162 = por %p160, %p161
      %p163 = scmp.ne.s32.totalorder %s152, %s153
      %p164 = scmp.eq.s32.totalorder %s30, 0
      %p165 = por %p163, %p164
      %p166 = scmp.ne.s32.totalorder %s152, %s153
      %p167 = scmp.eq.s32.totalorder %s31, 7
      %p168 = por %p166, %p167
      %p170 = scmp.ne.s32.totalorder %s153, %s169
      %p171 = scmp.eq.s32.totalorder %s31, 0
      %p172 = por %p170, %p171
      %p173 = scmp.le.s32.totalorder 1, %s25
      %p174 = scmp.lt.s32.totalorder %s25, 9
      %p175 = pnand %p173, %p174
      %p176 = pneg %p175
      // Predicated region
      $region9: #{tpu_custom_call.1} parent=5 // pred_check
        _
      $region10: #{tpu_custom_call.1} parent=5 // pred_check_branch
        %178 = sbr.rel (%p175) target = $region12
      $region11: #{tpu_custom_call.1} parent=5 // pred_region
        %s179 = ssub.s32 %s25, 1
        // Predicated region
        $region13: #{tpu_custom_call.1} parent=11 // pred_check
          %p180 = pneg %p92
        $region14: #{tpu_custom_call.1} parent=11 // pred_check_branch
          %182 = sbr.rel (%p180) target = $region16
        $region15: #{tpu_custom_call.1} parent=11 // pred_region
          %s184 = ssub.s32 8192, 8192
          %185 = vsyncadd [#allocation10], %s184
          %s186 = sshll.u32 [#allocation9], 4
          %s187 = int_to_ptr.vmem [resolvable:$true] %s186
          %192 = dma.hbm_to_vmem [thread:$0]  %s3, 8192, %s187, [#allocation10], 64, 64, 4
        $region16: #{tpu_custom_call.1} parent=11 // pred_fallthru
          _
        // Predicated region
        $region17: #{tpu_custom_call.1} parent=11 // pred_check
          %p193 = pneg %p139
        $region18: #{tpu_custom_call.1} parent=11 // pred_check_branch
          %195 = sbr.rel (%p193) target = $region20
        $region19: #{tpu_custom_call.1} parent=11 // pred_region
          %s197 = ssub.s32 1024, 1024
          %198 = vsyncadd [#allocation10], %s197
          %s199 = sshll.u32 [#allocation12], 4
          %s200 = int_to_ptr.vmem [resolvable:$true] %s199
          %205 = dma.hbm_to_vmem [thread:$0]  %s5, 1024, %s200, [#allocation10], 64, 64, 4
        $region20: #{tpu_custom_call.1} parent=11 // pred_fallthru
          _
      $region12: #{tpu_custom_call.1} parent=5 // pred_fallthru
        _
      %p206 = scmp.lt.s32.totalorder %s25, 8
      // Predicated region
      $region21: #{tpu_custom_call.1} parent=5 // pred_check
        %p207 = pneg %p206
      $region22: #{tpu_custom_call.1} parent=5 // pred_check_branch
        %209 = sbr.rel (%p207) target = $region24
      $region23: #{tpu_custom_call.1} parent=5 // pred_region
        // Predicated region
        $region25: #{tpu_custom_call.1} parent=23 // pred_check
          %p210 = pneg %p65
        $region26: #{tpu_custom_call.1} parent=23 // pred_check_branch
          %212 = sbr.rel (%p210) target = $region28
        $region27: #{tpu_custom_call.1} parent=23 // pred_region
          %s213 = sand.u32 %s25, 1
          %s214 = scalar_lea.sflag [#allocation7], %s213
          %s215 = sand.u32 %s55, 1
          %s216 = smul.addr %s215, 512
          %s217 = scalar_lea.vmem [#allocation6], %s216
          %s218 = smul.u32 %s32, 2
          %s219 = sadd.s32 %s218, %s33
          %s220 = sld [smem:[#allocation4 + %s219]]
          %s221 = smul.u32 32, %s32
          %s222 = smul.u32 4, %s220
          %s224 = ssub.s32 8192, 8192
          %225 = vsyncadd %s214, %s224
          %s226 = smul.addr %s221, 8
          %s227 = sadd.s32 %s222, %s226
          %s228 = smul.addr %s227, 64
          %s229 = scalar_lea.hbm %s2, %s228
          %s230 = sshll.u32 %s217, 4
          %s231 = int_to_ptr.vmem [resolvable:$true] %s230
          %236 = dma.hbm_to_vmem [thread:$0]  %s229, 8192, %s231, %s214, 512, 256, 16
        $region28: #{tpu_custom_call.1} parent=23 // pred_fallthru
          _
        // Predicated region
        $region29: #{tpu_custom_call.1} parent=23 // pred_check
          %p237 = pneg %p112
        $region30: #{tpu_custom_call.1} parent=23 // pred_check_branch
          %239 = sbr.rel (%p237) target = $region32
        $region31: #{tpu_custom_call.1} parent=23 // pred_region
          %s240 = sand.u32 %s25, 1
          %s241 = scalar_lea.sflag [#allocation7], %s240
          %s242 = sand.u32 %s102, 1
          %s243 = smul.addr %s242, 256
          %s244 = scalar_lea.vmem [#allocation11], %s243
          %s245 = smul.u32 32, %s32
          %s247 = ssub.s32 4096, 4096
          %248 = vsyncadd %s241, %s247
          %s249 = smul.addr %s245, 128
          %s250 = scalar_lea.hbm %s4, %s249
          %s251 = sshll.u32 %s244, 4
          %s252 = int_to_ptr.vmem [resolvable:$true] %s251
          %257 = dma.hbm_to_vmem [thread:$0]  %s250, 4096, %s252, %s241, 128, 128, 8
        $region32: #{tpu_custom_call.1} parent=23 // pred_fallthru
          _
      $region24: #{tpu_custom_call.1} parent=5 // pred_fallthru
        _
      %p258 = scmp.le.s32.totalorder 1, %s25
      %p259 = scmp.lt.s32.totalorder %s25, 9
      %p260 = pnand %p258, %p259
      %p261 = pneg %p260
      // Predicated region
      $region33: #{tpu_custom_call.1} parent=5 // pred_check
        _
      $region34: #{tpu_custom_call.1} parent=5 // pred_check_branch
        %263 = sbr.rel (%p260) target = $region36
      $region35: #{tpu_custom_call.1} parent=5 // pred_region
        %s264 = ssub.s32 %s25, 1
        %s265 = sand.u32 %s30, 1
        %s266 = scalar_lea.sflag [#allocation7], %s265
        %s267 = sand.u32 %s58, 1
        %s268 = smul.addr %s267, 512
        %s269 = scalar_lea.vmem [#allocation6], %s268
        // Predicated region
        $region37: #{tpu_custom_call.1} parent=35 // pred_check
          %p270 = pneg %p71
        $region38: #{tpu_custom_call.1} parent=35 // pred_check_branch
          %272 = sbr.rel (%p270) target = $region40
        $region39: #{tpu_custom_call.1} parent=35 // pred_region
          %273 = dma.done %s266, 8192
        $region40: #{tpu_custom_call.1} parent=35 // pred_fallthru
          _
        // Predicated region
        $region41: #{tpu_custom_call.1} parent=35 // pred_check
          %p274 = pneg %p92
        $region42: #{tpu_custom_call.1} parent=35 // pred_check_branch
          %276 = sbr.rel (%p274) target = $region44
        $region43: #{tpu_custom_call.1} parent=35 // pred_region
          %277 = dma.done [#allocation10], 8192
        $region44: #{tpu_custom_call.1} parent=35 // pred_fallthru
          _
        %s278 = sand.u32 %s30, 1
        %s279 = scalar_lea.sflag [#allocation7], %s278
        %s280 = sand.u32 %s105, 1
        %s281 = smul.addr %s280, 256
        %s282 = scalar_lea.vmem [#allocation11], %s281
        // Predicated region
        $region45: #{tpu_custom_call.1} parent=35 // pred_check
          %p283 = pneg %p118
        $region46: #{tpu_custom_call.1} parent=35 // pred_check_branch
          %285 = sbr.rel (%p283) target = $region48
        $region47: #{tpu_custom_call.1} parent=35 // pred_region
          %286 = dma.done %s279, 4096
        $region48: #{tpu_custom_call.1} parent=35 // pred_fallthru
          _
        // Predicated region
        $region49: #{tpu_custom_call.1} parent=35 // pred_check
          %p287 = pneg %p139
        $region50: #{tpu_custom_call.1} parent=35 // pred_check_branch
          %289 = sbr.rel (%p287) target = $region52
        $region51: #{tpu_custom_call.1} parent=35 // pred_region
          %290 = dma.done [#allocation10], 1024
        $region52: #{tpu_custom_call.1} parent=35 // pred_fallthru
          _
        %s291 = sand.u32 %s30, 1
        %s292 = scalar_lea.sflag [#allocation7], %s291
        %s293 = sand.u32 %s58, 1
        %s294 = smul.addr %s293, 512
        %s295 = scalar_lea.vmem [#allocation6], %s294
        %p296 = pneg %p71
        %p297 = pneg %p68
        %p298 = pneg %p92
        %p299 = pneg %p89
        %s300 = sand.u32 %s30, 1
        %s301 = scalar_lea.sflag [#allocation7], %s300
        %s302 = sand.u32 %s105, 1
        %s303 = smul.addr %s302, 256
        %s304 = scalar_lea.vmem [#allocation11], %s303
        %p305 = pneg %p118
        %p306 = pneg %p115
        %p307 = pneg %p139
        %p308 = pneg %p136
        %p309 = pneg %p165
        %p310 = pneg %p162
        %s311 = sand.u32 %s152, 1
        %s312 = scalar_lea.sflag [#allocation8], %s311
        %s313 = sand.u32 %s152, 1
        %s314 = smul.addr %s313, 256
        %s315 = scalar_lea.vmem [#allocation13], %s314
        %s316 = smul.u32 %s34, 2
        %s317 = sadd.s32 %s316, %s35
        %s318 = sld [smem:[#allocation4 + %s317]]
        %s319 = smul.u32 32, %s34
        %s320 = smul.u32 4, %s318
        %s321 = smul.u32 32, %s34
        %s322 = smul.u32 32, %s34
        %p324 = scmp.eq.s32.totalorder %s35, 0
        // Predicated region
        $region53: #{tpu_custom_call.1} parent=35 // pred_check
          %p325 = pneg %p324
        $region54: #{tpu_custom_call.1} parent=35 // pred_check_branch
          %327 = sbr.rel (%p325) target = $region56
        $region55: #{tpu_custom_call.1} parent=35 // pred_region
          %328 = vst [vmem:[#allocation2] sm:$0xff] 0.0
          %329 = vst [vmem:[#allocation2 + $0x8] sm:$0xff] 0.0
          %330 = vst [vmem:[#allocation2 + $0x10] sm:$0xff] 0.0
          %331 = vst [vmem:[#allocation2 + $0x18] sm:$0xff] 0.0
          %332 = vst [vmem:[#allocation2 + $0x20] sm:$0xff] 0.0
          %333 = vst [vmem:[#allocation2 + $0x28] sm:$0xff] 0.0
          %334 = vst [vmem:[#allocation2 + $0x30] sm:$0xff] 0.0
          %335 = vst [vmem:[#allocation2 + $0x38] sm:$0xff] 0.0
          %336 = vst [vmem:[#allocation2 + $0x40] sm:$0xff] 0.0
          %337 = vst [vmem:[#allocation2 + $0x48] sm:$0xff] 0.0
          %338 = vst [vmem:[#allocation2 + $0x50] sm:$0xff] 0.0
          %339 = vst [vmem:[#allocation2 + $0x58] sm:$0xff] 0.0
          %340 = vst [vmem:[#allocation2 + $0x60] sm:$0xff] 0.0
          %341 = vst [vmem:[#allocation2 + $0x68] sm:$0xff] 0.0
          %342 = vst [vmem:[#allocation2 + $0x70] sm:$0xff] 0.0
          %343 = vst [vmem:[#allocation2 + $0x78] sm:$0xff] 0.0
          %344 = vst [vmem:[#allocation2 + $0x80] sm:$0xff] 0.0
          %345 = vst [vmem:[#allocation2 + $0x88] sm:$0xff] 0.0
          %346 = vst [vmem:[#allocation2 + $0x90] sm:$0xff] 0.0
          %347 = vst [vmem:[#allocation2 + $0x98] sm:$0xff] 0.0
          %348 = vst [vmem:[#allocation2 + $0xa0] sm:$0xff] 0.0
          %349 = vst [vmem:[#allocation2 + $0xa8] sm:$0xff] 0.0
          %350 = vst [vmem:[#allocation2 + $0xb0] sm:$0xff] 0.0
          %351 = vst [vmem:[#allocation2 + $0xb8] sm:$0xff] 0.0
          %352 = vst [vmem:[#allocation2 + $0xc0] sm:$0xff] 0.0
          %353 = vst [vmem:[#allocation2 + $0xc8] sm:$0xff] 0.0
          %354 = vst [vmem:[#allocation2 + $0xd0] sm:$0xff] 0.0
          %355 = vst [vmem:[#allocation2 + $0xd8] sm:$0xff] 0.0
          %356 = vst [vmem:[#allocation2 + $0xe0] sm:$0xff] 0.0
          %357 = vst [vmem:[#allocation2 + $0xe8] sm:$0xff] 0.0
          %358 = vst [vmem:[#allocation2 + $0xf0] sm:$0xff] 0.0
          %359 = vst [vmem:[#allocation2 + $0xf8] sm:$0xff] 0.0
        $region56: #{tpu_custom_call.1} parent=35 // pred_fallthru
          _
        %s360 = sld [smem:[#allocation5 + %s34]]
        %p361 = scmp.lt.s32.totalorder %s35, %s360
        // Predicated region
        $region57: #{tpu_custom_call.1} parent=35 // pred_check
          %p362 = pneg %p361
        $region58: #{tpu_custom_call.1} parent=35 // pred_check_branch
          %364 = sbr.rel (%p362) target = $region60
        $region59: #{tpu_custom_call.1} parent=35 // pred_region
          %s365 = smul.u32 %s34, 2
          %s366 = sadd.s32 %s365, %s35
          %s367 = sld [smem:[#allocation4 + %s366]]
          %s368 = smul.u32 %s367, 512
          %s369 = sshra.s32 %s368, 3
          %s370 = sand.u32 %s368, 7
          %s371 = smul.addr %s369, 4
          %s372 = scalar_lea.vmem [#allocation9], %s371
          %v373 = vld [vmem:[%s372] sm:$0xf]
          %v374 = vld [vmem:[%s372 + $0x4] sm:$0xf]
          %v375 = vld [vmem:[%s372 + $0x8] sm:$0xf]
          %v376 = vld [vmem:[%s372 + $0xc] sm:$0xf]
          %v377 = vld [vmem:[%s372 + $0x10] sm:$0xf]
          %v378 = vld [vmem:[%s372 + $0x14] sm:$0xf]
          %v379 = vld [vmem:[%s372 + $0x18] sm:$0xf]
          %v380 = vld [vmem:[%s372 + $0x1c] sm:$0xf]
          %v381 = vld [vmem:[%s372 + $0x20] sm:$0xf]
          %v382 = vld [vmem:[%s372 + $0x24] sm:$0xf]
          %v383 = vld [vmem:[%s372 + $0x28] sm:$0xf]
          %v384 = vld [vmem:[%s372 + $0x2c] sm:$0xf]
          %v385 = vld [vmem:[%s372 + $0x30] sm:$0xf]
          %v386 = vld [vmem:[%s372 + $0x34] sm:$0xf]
          %v387 = vld [vmem:[%s372 + $0x38] sm:$0xf]
          %v388 = vld [vmem:[%s372 + $0x3c] sm:$0xf]
          %v389 = vld [vmem:[%s372 + $0x40] sm:$0xf]
          %v390 = vld [vmem:[%s372 + $0x44] sm:$0xf]
          %v391 = vld [vmem:[%s372 + $0x48] sm:$0xf]
          %v392 = vld [vmem:[%s372 + $0x4c] sm:$0xf]
          %v393 = vld [vmem:[%s372 + $0x50] sm:$0xf]
          %v394 = vld [vmem:[%s372 + $0x54] sm:$0xf]
          %v395 = vld [vmem:[%s372 + $0x58] sm:$0xf]
          %v396 = vld [vmem:[%s372 + $0x5c] sm:$0xf]
          %v397 = vld [vmem:[%s372 + $0x60] sm:$0xf]
          %v398 = vld [vmem:[%s372 + $0x64] sm:$0xf]
          %v399 = vld [vmem:[%s372 + $0x68] sm:$0xf]
          %v400 = vld [vmem:[%s372 + $0x6c] sm:$0xf]
          %v401 = vld [vmem:[%s372 + $0x70] sm:$0xf]
          %v402 = vld [vmem:[%s372 + $0x74] sm:$0xf]
          %v403 = vld [vmem:[%s372 + $0x78] sm:$0xf]
          %v404 = vld [vmem:[%s372 + $0x7c] sm:$0xf]
          %v405 = vld [vmem:[%s372 + $0x80] sm:$0xf]
          %v406 = vld [vmem:[%s372 + $0x84] sm:$0xf]
          %v407 = vld [vmem:[%s372 + $0x88] sm:$0xf]
          %v408 = vld [vmem:[%s372 + $0x8c] sm:$0xf]
          %v409 = vld [vmem:[%s372 + $0x90] sm:$0xf]
          %v410 = vld [vmem:[%s372 + $0x94] sm:$0xf]
          %v411 = vld [vmem:[%s372 + $0x98] sm:$0xf]
          %v412 = vld [vmem:[%s372 + $0x9c] sm:$0xf]
          %v413 = vld [vmem:[%s372 + $0xa0] sm:$0xf]
          %v414 = vld [vmem:[%s372 + $0xa4] sm:$0xf]
          %v415 = vld [vmem:[%s372 + $0xa8] sm:$0xf]
          %v416 = vld [vmem:[%s372 + $0xac] sm:$0xf]
          %v417 = vld [vmem:[%s372 + $0xb0] sm:$0xf]
          %v418 = vld [vmem:[%s372 + $0xb4] sm:$0xf]
          %v419 = vld [vmem:[%s372 + $0xb8] sm:$0xf]
          %v420 = vld [vmem:[%s372 + $0xbc] sm:$0xf]
          %v421 = vld [vmem:[%s372 + $0xc0] sm:$0xf]
          %v422 = vld [vmem:[%s372 + $0xc4] sm:$0xf]
          %v423 = vld [vmem:[%s372 + $0xc8] sm:$0xf]
          %v424 = vld [vmem:[%s372 + $0xcc] sm:$0xf]
          %v425 = vld [vmem:[%s372 + $0xd0] sm:$0xf]
          %v426 = vld [vmem:[%s372 + $0xd4] sm:$0xf]
          %v427 = vld [vmem:[%s372 + $0xd8] sm:$0xf]
          %v428 = vld [vmem:[%s372 + $0xdc] sm:$0xf]
          %v429 = vld [vmem:[%s372 + $0xe0] sm:$0xf]
          %v430 = vld [vmem:[%s372 + $0xe4] sm:$0xf]
          %v431 = vld [vmem:[%s372 + $0xe8] sm:$0xf]
          %v432 = vld [vmem:[%s372 + $0xec] sm:$0xf]
          %v433 = vld [vmem:[%s372 + $0xf0] sm:$0xf]
          %v434 = vld [vmem:[%s372 + $0xf4] sm:$0xf]
          %v435 = vld [vmem:[%s372 + $0xf8] sm:$0xf]
          %v436 = vld [vmem:[%s372 + $0xfc] sm:$0xf]
          %v437 = vld [vmem:[#allocation2] sm:$0xff]
          %v438 = vld [vmem:[#allocation2 + $0x8] sm:$0xff]
          %v439 = vld [vmem:[#allocation2 + $0x10] sm:$0xff]
          %v440 = vld [vmem:[#allocation2 + $0x18] sm:$0xff]
          %v441 = vld [vmem:[#allocation2 + $0x20] sm:$0xff]
          %v442 = vld [vmem:[#allocation2 + $0x28] sm:$0xff]
          %v443 = vld [vmem:[#allocation2 + $0x30] sm:$0xff]
          %v444 = vld [vmem:[#allocation2 + $0x38] sm:$0xff]
          %v445 = vld [vmem:[#allocation2 + $0x40] sm:$0xff]
          %v446 = vld [vmem:[#allocation2 + $0x48] sm:$0xff]
          %v447 = vld [vmem:[#allocation2 + $0x50] sm:$0xff]
          %v448 = vld [vmem:[#allocation2 + $0x58] sm:$0xff]
          %v449 = vld [vmem:[#allocation2 + $0x60] sm:$0xff]
          %v450 = vld [vmem:[#allocation2 + $0x68] sm:$0xff]
          %v451 = vld [vmem:[#allocation2 + $0x70] sm:$0xff]
          %v452 = vld [vmem:[#allocation2 + $0x78] sm:$0xff]
          %v453 = vld [vmem:[#allocation2 + $0x80] sm:$0xff]
          %v454 = vld [vmem:[#allocation2 + $0x88] sm:$0xff]
          %v455 = vld [vmem:[#allocation2 + $0x90] sm:$0xff]
          %v456 = vld [vmem:[#allocation2 + $0x98] sm:$0xff]
          %v457 = vld [vmem:[#allocation2 + $0xa0] sm:$0xff]
          %v458 = vld [vmem:[#allocation2 + $0xa8] sm:$0xff]
          %v459 = vld [vmem:[#allocation2 + $0xb0] sm:$0xff]
          %v460 = vld [vmem:[#allocation2 + $0xb8] sm:$0xff]
          %v461 = vld [vmem:[#allocation2 + $0xc0] sm:$0xff]
          %v462 = vld [vmem:[#allocation2 + $0xc8] sm:$0xff]
          %v463 = vld [vmem:[#allocation2 + $0xd0] sm:$0xff]
          %v464 = vld [vmem:[#allocation2 + $0xd8] sm:$0xff]
          %v465 = vld [vmem:[#allocation2 + $0xe0] sm:$0xff]
          %v466 = vld [vmem:[#allocation2 + $0xe8] sm:$0xff]
          %v467 = vld [vmem:[#allocation2 + $0xf0] sm:$0xff]
          %v468 = vld [vmem:[#allocation2 + $0xf8] sm:$0xff]
          %v469 = vld [vmem:[%s269] sm:$0xff]
          %v470 = vld [vmem:[%s269 + $0x8] sm:$0xff]
          %v471 = vld [vmem:[%s269 + $0x10] sm:$0xff]
          %v472 = vld [vmem:[%s269 + $0x18] sm:$0xff]
          %v473 = vld [vmem:[%s269 + $0x20] sm:$0xff]
          %v474 = vld [vmem:[%s269 + $0x28] sm:$0xff]
          %v475 = vld [vmem:[%s269 + $0x30] sm:$0xff]
          %v476 = vld [vmem:[%s269 + $0x38] sm:$0xff]
          %v477 = vld [vmem:[%s269 + $0x40] sm:$0xff]
          %v478 = vld [vmem:[%s269 + $0x48] sm:$0xff]
          %v479 = vld [vmem:[%s269 + $0x50] sm:$0xff]
          %v480 = vld [vmem:[%s269 + $0x58] sm:$0xff]
          %v481 = vld [vmem:[%s269 + $0x60] sm:$0xff]
          %v482 = vld [vmem:[%s269 + $0x68] sm:$0xff]
          %v483 = vld [vmem:[%s269 + $0x70] sm:$0xff]
          %v484 = vld [vmem:[%s269 + $0x78] sm:$0xff]
          %v485 = vld [vmem:[%s269 + $0x80] sm:$0xff]
          %v486 = vld [vmem:[%s269 + $0x88] sm:$0xff]
          %v487 = vld [vmem:[%s269 + $0x90] sm:$0xff]
          %v488 = vld [vmem:[%s269 + $0x98] sm:$0xff]
          %v489 = vld [vmem:[%s269 + $0xa0] sm:$0xff]
          %v490 = vld [vmem:[%s269 + $0xa8] sm:$0xff]
          %v491 = vld [vmem:[%s269 + $0xb0] sm:$0xff]
          %v492 = vld [vmem:[%s269 + $0xb8] sm:$0xff]
          %v493 = vld [vmem:[%s269 + $0xc0] sm:$0xff]
          %v494 = vld [vmem:[%s269 + $0xc8] sm:$0xff]
          %v495 = vld [vmem:[%s269 + $0xd0] sm:$0xff]
          %v496 = vld [vmem:[%s269 + $0xd8] sm:$0xff]
          %v497 = vld [vmem:[%s269 + $0xe0] sm:$0xff]
          %v498 = vld [vmem:[%s269 + $0xe8] sm:$0xff]
          %v499 = vld [vmem:[%s269 + $0xf0] sm:$0xff]
          %v500 = vld [vmem:[%s269 + $0xf8] sm:$0xff]
          %v501 = vld [vmem:[%s269 + $0x100] sm:$0xff]
          %v502 = vld [vmem:[%s269 + $0x108] sm:$0xff]
          %v503 = vld [vmem:[%s269 + $0x110] sm:$0xff]
          %v504 = vld [vmem:[%s269 + $0x118] sm:$0xff]
          %v505 = vld [vmem:[%s269 + $0x120] sm:$0xff]
          %v506 = vld [vmem:[%s269 + $0x128] sm:$0xff]
          %v507 = vld [vmem:[%s269 + $0x130] sm:$0xff]
          %v508 = vld [vmem:[%s269 + $0x138] sm:$0xff]
          %v509 = vld [vmem:[%s269 + $0x140] sm:$0xff]
          %v510 = vld [vmem:[%s269 + $0x148] sm:$0xff]
          %v511 = vld [vmem:[%s269 + $0x150] sm:$0xff]
          %v512 = vld [vmem:[%s269 + $0x158] sm:$0xff]
          %v513 = vld [vmem:[%s269 + $0x160] sm:$0xff]
          %v514 = vld [vmem:[%s269 + $0x168] sm:$0xff]
          %v515 = vld [vmem:[%s269 + $0x170] sm:$0xff]
          %v516 = vld [vmem:[%s269 + $0x178] sm:$0xff]
          %v517 = vld [vmem:[%s269 + $0x180] sm:$0xff]
          %v518 = vld [vmem:[%s269 + $0x188] sm:$0xff]
          %v519 = vld [vmem:[%s269 + $0x190] sm:$0xff]
          %v520 = vld [vmem:[%s269 + $0x198] sm:$0xff]
          %v521 = vld [vmem:[%s269 + $0x1a0] sm:$0xff]
          %v522 = vld [vmem:[%s269 + $0x1a8] sm:$0xff]
          %v523 = vld [vmem:[%s269 + $0x1b0] sm:$0xff]
          %v524 = vld [vmem:[%s269 + $0x1b8] sm:$0xff]
          %v525 = vld [vmem:[%s269 + $0x1c0] sm:$0xff]
          %v526 = vld [vmem:[%s269 + $0x1c8] sm:$0xff]
          %v527 = vld [vmem:[%s269 + $0x1d0] sm:$0xff]
          %v528 = vld [vmem:[%s269 + $0x1d8] sm:$0xff]
          %v529 = vld [vmem:[%s269 + $0x1e0] sm:$0xff]
          %v530 = vld [vmem:[%s269 + $0x1e8] sm:$0xff]
          %v531 = vld [vmem:[%s269 + $0x1f0] sm:$0xff]
          %v532 = vld [vmem:[%s269 + $0x1f8] sm:$0xff]
          %v597 = vunpack.c.l.b16 %v469
          %v598 = vunpack.c.h.b16 %v469
          %v599 = vunpack.c.l.b16 %v470
          %v600 = vunpack.c.h.b16 %v470
          %v601 = vunpack.c.l.b16 %v471
          %v602 = vunpack.c.h.b16 %v471
          %v603 = vunpack.c.l.b16 %v472
          %v604 = vunpack.c.h.b16 %v472
          %v605 = vunpack.c.l.b16 %v473
          %v606 = vunpack.c.h.b16 %v473
          %v607 = vunpack.c.l.b16 %v474
          %v608 = vunpack.c.h.b16 %v474
          %v609 = vunpack.c.l.b16 %v475
          %v610 = vunpack.c.h.b16 %v475
          %v611 = vunpack.c.l.b16 %v476
          %v612 = vunpack.c.h.b16 %v476
          %v613 = vunpack.c.l.b16 %v477
          %v614 = vunpack.c.h.b16 %v477
          %v615 = vunpack.c.l.b16 %v478
          %v616 = vunpack.c.h.b16 %v478
          %v617 = vunpack.c.l.b16 %v479
          %v618 = vunpack.c.h.b16 %v479
          %v619 = vunpack.c.l.b16 %v480
          %v620 = vunpack.c.h.b16 %v480
          %v621 = vunpack.c.l.b16 %v481
          %v622 = vunpack.c.h.b16 %v481
          %v623 = vunpack.c.l.b16 %v482
          %v624 = vunpack.c.h.b16 %v482
          %v625 = vunpack.c.l.b16 %v483
          %v626 = vunpack.c.h.b16 %v483
          %v627 = vunpack.c.l.b16 %v484
          %v628 = vunpack.c.h.b16 %v484
          %v629 = vunpack.c.l.b16 %v485
          %v630 = vunpack.c.h.b16 %v485
          %v631 = vunpack.c.l.b16 %v486
          %v632 = vunpack.c.h.b16 %v486
          %v633 = vunpack.c.l.b16 %v487
          %v634 = vunpack.c.h.b16 %v487
          %v635 = vunpack.c.l.b16 %v488
          %v636 = vunpack.c.h.b16 %v488
          %v637 = vunpack.c.l.b16 %v489
          %v638 = vunpack.c.h.b16 %v489
          %v639 = vunpack.c.l.b16 %v490
          %v640 = vunpack.c.h.b16 %v490
          %v641 = vunpack.c.l.b16 %v491
          %v642 = vunpack.c.h.b16 %v491
          %v643 = vunpack.c.l.b16 %v492
          %v644 = vunpack.c.h.b16 %v492
          %v645 = vunpack.c.l.b16 %v493
          %v646 = vunpack.c.h.b16 %v493
          %v647 = vunpack.c.l.b16 %v494
          %v648 = vunpack.c.h.b16 %v494
          %v649 = vunpack.c.l.b16 %v495
          %v650 = vunpack.c.h.b16 %v495
          %v651 = vunpack.c.l.b16 %v496
          %v652 = vunpack.c.h.b16 %v496
          %v653 = vunpack.c.l.b16 %v497
          %v654 = vunpack.c.h.b16 %v497
          %v655 = vunpack.c.l.b16 %v498
          %v656 = vunpack.c.h.b16 %v498
          %v657 = vunpack.c.l.b16 %v499
          %v658 = vunpack.c.h.b16 %v499
          %v659 = vunpack.c.l.b16 %v500
          %v660 = vunpack.c.h.b16 %v500
          %v661 = vunpack.c.l.b16 %v501
          %v662 = vunpack.c.h.b16 %v501
          %v663 = vunpack.c.l.b16 %v502
          %v664 = vunpack.c.h.b16 %v502
          %v665 = vunpack.c.l.b16 %v503
          %v666 = vunpack.c.h.b16 %v503
          %v667 = vunpack.c.l.b16 %v504
          %v668 = vunpack.c.h.b16 %v504
          %v669 = vunpack.c.l.b16 %v505
          %v670 = vunpack.c.h.b16 %v505
          %v671 = vunpack.c.l.b16 %v506
          %v672 = vunpack.c.h.b16 %v506
          %v673 = vunpack.c.l.b16 %v507
          %v674 = vunpack.c.h.b16 %v507
          %v675 = vunpack.c.l.b16 %v508
          %v676 = vunpack.c.h.b16 %v508
          %v677 = vunpack.c.l.b16 %v509
          %v678 = vunpack.c.h.b16 %v509
          %v679 = vunpack.c.l.b16 %v510
          %v680 = vunpack.c.h.b16 %v510
          %v681 = vunpack.c.l.b16 %v511
          %v682 = vunpack.c.h.b16 %v511
          %v683 = vunpack.c.l.b16 %v512
          %v684 = vunpack.c.h.b16 %v512
          %v685 = vunpack.c.l.b16 %v513
          %v686 = vunpack.c.h.b16 %v513
          %v687 = vunpack.c.l.b16 %v514
          %v688 = vunpack.c.h.b16 %v514
          %v689 = vunpack.c.l.b16 %v515
          %v690 = vunpack.c.h.b16 %v515
          %v691 = vunpack.c.l.b16 %v516
          %v692 = vunpack.c.h.b16 %v516
          %v693 = vunpack.c.l.b16 %v517
          %v694 = vunpack.c.h.b16 %v517
          %v695 = vunpack.c.l.b16 %v518
          %v696 = vunpack.c.h.b16 %v518
          %v697 = vunpack.c.l.b16 %v519
          %v698 = vunpack.c.h.b16 %v519
          %v699 = vunpack.c.l.b16 %v520
          %v700 = vunpack.c.h.b16 %v520
          %v701 = vunpack.c.l.b16 %v521
          %v702 = vunpack.c.h.b16 %v521
          %v703 = vunpack.c.l.b16 %v522
          %v704 = vunpack.c.h.b16 %v522
          %v705 = vunpack.c.l.b16 %v523
          %v706 = vunpack.c.h.b16 %v523
          %v707 = vunpack.c.l.b16 %v524
          %v708 = vunpack.c.h.b16 %v524
          %v709 = vunpack.c.l.b16 %v525
          %v710 = vunpack.c.h.b16 %v525
          %v711 = vunpack.c.l.b16 %v526
          %v712 = vunpack.c.h.b16 %v526
          %v713 = vunpack.c.l.b16 %v527
          %v714 = vunpack.c.h.b16 %v527
          %v715 = vunpack.c.l.b16 %v528
          %v716 = vunpack.c.h.b16 %v528
          %v717 = vunpack.c.l.b16 %v529
          %v718 = vunpack.c.h.b16 %v529
          %v719 = vunpack.c.l.b16 %v530
          %v720 = vunpack.c.h.b16 %v530
          %v721 = vunpack.c.l.b16 %v531
          %v722 = vunpack.c.h.b16 %v531
          %v723 = vunpack.c.l.b16 %v532
          %v724 = vunpack.c.h.b16 %v532
          %v725 = vpack.c.b16 %v601, %v597
          %v726 = vpack.c.b16 %v602, %v598
          %v727 = vpack.c.b16 %v603, %v599
          %v728 = vpack.c.b16 %v604, %v600
          %v729 = vpack.c.b16 %v609, %v605
          %v730 = vpack.c.b16 %v610, %v606
          %v731 = vpack.c.b16 %v611, %v607
          %v732 = vpack.c.b16 %v612, %v608
          %v733 = vpack.c.b16 %v617, %v613
          %v734 = vpack.c.b16 %v618, %v614
          %v735 = vpack.c.b16 %v619, %v615
          %v736 = vpack.c.b16 %v620, %v616
          %v737 = vpack.c.b16 %v625, %v621
          %v738 = vpack.c.b16 %v626, %v622
          %v739 = vpack.c.b16 %v627, %v623
          %v740 = vpack.c.b16 %v628, %v624
          %v741 = vpack.c.b16 %v633, %v629
          %v742 = vpack.c.b16 %v634, %v630
          %v743 = vpack.c.b16 %v635, %v631
          %v744 = vpack.c.b16 %v636, %v632
          %v745 = vpack.c.b16 %v641, %v637
          %v746 = vpack.c.b16 %v642, %v638
          %v747 = vpack.c.b16 %v643, %v639
          %v748 = vpack.c.b16 %v644, %v640
          %v749 = vpack.c.b16 %v649, %v645
          %v750 = vpack.c.b16 %v650, %v646
          %v751 = vpack.c.b16 %v651, %v647
          %v752 = vpack.c.b16 %v652, %v648
          %v753 = vpack.c.b16 %v657, %v653
          %v754 = vpack.c.b16 %v658, %v654
          %v755 = vpack.c.b16 %v659, %v655
          %v756 = vpack.c.b16 %v660, %v656
          %v757 = vpack.c.b16 %v665, %v661
          %v758 = vpack.c.b16 %v666, %v662
          %v759 = vpack.c.b16 %v667, %v663
          %v760 = vpack.c.b16 %v668, %v664
          %v761 = vpack.c.b16 %v673, %v669
          %v762 = vpack.c.b16 %v674, %v670
          %v763 = vpack.c.b16 %v675, %v671
          %v764 = vpack.c.b16 %v676, %v672
          %v765 = vpack.c.b16 %v681, %v677
          %v766 = vpack.c.b16 %v682, %v678
          %v767 = vpack.c.b16 %v683, %v679
          %v768 = vpack.c.b16 %v684, %v680
          %v769 = vpack.c.b16 %v689, %v685
          %v770 = vpack.c.b16 %v690, %v686
          %v771 = vpack.c.b16 %v691, %v687
          %v772 = vpack.c.b16 %v692, %v688
          %v773 = vpack.c.b16 %v697, %v693
          %v774 = vpack.c.b16 %v698, %v694
          %v775 = vpack.c.b16 %v699, %v695
          %v776 = vpack.c.b16 %v700, %v696
          %v777 = vpack.c.b16 %v705, %v701
          %v778 = vpack.c.b16 %v706, %v702
          %v779 = vpack.c.b16 %v707, %v703
          %v780 = vpack.c.b16 %v708, %v704
          %v781 = vpack.c.b16 %v713, %v709
          %v782 = vpack.c.b16 %v714, %v710
          %v783 = vpack.c.b16 %v715, %v711
          %v784 = vpack.c.b16 %v716, %v712
          %v785 = vpack.c.b16 %v721, %v717
          %v786 = vpack.c.b16 %v722, %v718
          %v787 = vpack.c.b16 %v723, %v719
          %v788 = vpack.c.b16 %v724, %v720
          %v917 = vunpack.c.l.b16 %v373
          %v918 = vunpack.c.l.b16 %v374
          %v919 = vunpack.c.l.b16 %v375
          %v920 = vunpack.c.l.b16 %v376
          %v921 = vunpack.c.l.b16 %v377
          %v922 = vunpack.c.l.b16 %v378
          %v923 = vunpack.c.l.b16 %v379
          %v924 = vunpack.c.l.b16 %v380
          %v925 = vunpack.c.l.b16 %v381
          %v926 = vunpack.c.l.b16 %v382
          %v927 = vunpack.c.l.b16 %v383
          %v928 = vunpack.c.l.b16 %v384
          %v929 = vunpack.c.l.b16 %v385
          %v930 = vunpack.c.l.b16 %v386
          %v931 = vunpack.c.l.b16 %v387
          %v932 = vunpack.c.l.b16 %v388
          %v933 = vunpack.c.l.b16 %v389
          %v934 = vunpack.c.l.b16 %v390
          %v935 = vunpack.c.l.b16 %v391
          %v936 = vunpack.c.l.b16 %v392
          %v937 = vunpack.c.l.b16 %v393
          %v938 = vunpack.c.l.b16 %v394
          %v939 = vunpack.c.l.b16 %v395
          %v940 = vunpack.c.l.b16 %v396
          %v941 = vunpack.c.l.b16 %v397
          %v942 = vunpack.c.l.b16 %v398
          %v943 = vunpack.c.l.b16 %v399
          %v944 = vunpack.c.l.b16 %v400
          %v945 = vunpack.c.l.b16 %v401
          %v946 = vunpack.c.l.b16 %v402
          %v947 = vunpack.c.l.b16 %v403
          %v948 = vunpack.c.l.b16 %v404
          %v949 = vunpack.c.l.b16 %v405
          %v950 = vunpack.c.l.b16 %v406
          %v951 = vunpack.c.l.b16 %v407
          %v952 = vunpack.c.l.b16 %v408
          %v953 = vunpack.c.l.b16 %v409
          %v954 = vunpack.c.l.b16 %v410
          %v955 = vunpack.c.l.b16 %v411
          %v956 = vunpack.c.l.b16 %v412
          %v957 = vunpack.c.l.b16 %v413
          %v958 = vunpack.c.l.b16 %v414
          %v959 = vunpack.c.l.b16 %v415
          %v960 = vunpack.c.l.b16 %v416
          %v961 = vunpack.c.l.b16 %v417
          %v962 = vunpack.c.l.b16 %v418
          %v963 = vunpack.c.l.b16 %v419
          %v964 = vunpack.c.l.b16 %v420
          %v965 = vunpack.c.l.b16 %v421
          %v966 = vunpack.c.l.b16 %v422
          %v967 = vunpack.c.l.b16 %v423
          %v968 = vunpack.c.l.b16 %v424
          %v969 = vunpack.c.l.b16 %v425
          %v970 = vunpack.c.l.b16 %v426
          %v971 = vunpack.c.l.b16 %v427
          %v972 = vunpack.c.l.b16 %v428
          %v973 = vunpack.c.l.b16 %v429
          %v974 = vunpack.c.l.b16 %v430
          %v975 = vunpack.c.l.b16 %v431
          %v976 = vunpack.c.l.b16 %v432
          %v977 = vunpack.c.l.b16 %v433
          %v978 = vunpack.c.l.b16 %v434
          %v979 = vunpack.c.l.b16 %v435
          %v980 = vunpack.c.l.b16 %v436
          %v981 = vpack.c.b16 %v918, %v917
          %v982 = vpack.c.b16 %v920, %v919
          %v983 = vpack.c.b16 %v922, %v921
          %v984 = vpack.c.b16 %v924, %v923
          %v985 = vpack.c.b16 %v926, %v925
          %v986 = vpack.c.b16 %v928, %v927
          %v987 = vpack.c.b16 %v930, %v929
          %v988 = vpack.c.b16 %v932, %v931
          %v989 = vpack.c.b16 %v934, %v933
          %v990 = vpack.c.b16 %v936, %v935
          %v991 = vpack.c.b16 %v938, %v937
          %v992 = vpack.c.b16 %v940, %v939
          %v993 = vpack.c.b16 %v942, %v941
          %v994 = vpack.c.b16 %v944, %v943
          %v995 = vpack.c.b16 %v946, %v945
          %v996 = vpack.c.b16 %v948, %v947
          %v997 = vpack.c.b16 %v950, %v949
          %v998 = vpack.c.b16 %v952, %v951
          %v999 = vpack.c.b16 %v954, %v953
          %v1000 = vpack.c.b16 %v956, %v955
          %v1001 = vpack.c.b16 %v958, %v957
          %v1002 = vpack.c.b16 %v960, %v959
          %v1003 = vpack.c.b16 %v962, %v961
          %v1004 = vpack.c.b16 %v964, %v963
          %v1005 = vpack.c.b16 %v966, %v965
          %v1006 = vpack.c.b16 %v968, %v967
          %v1007 = vpack.c.b16 %v970, %v969
          %v1008 = vpack.c.b16 %v972, %v971
          %v1009 = vpack.c.b16 %v974, %v973
          %v1010 = vpack.c.b16 %v976, %v975
          %v1011 = vpack.c.b16 %v978, %v977
          %v1012 = vpack.c.b16 %v980, %v979
          %1045 = vmatprep.subr.bf16.mxu0 0
          %1046 = vmatpush1.bf16.msra.mxu0 %v981
          %1047 = vmatprep.subr.bf16.mxu0 0
          %1048 = vmatpush1.bf16.msra.mxu0 %v982
          %1049 = vmatprep.subr.bf16.mxu0 0
          %1050 = vmatpush1.bf16.msra.mxu0 %v983
          %1051 = vmatprep.subr.bf16.mxu0 0
          %1052 = vmatpush1.bf16.msra.mxu0 %v984
          %1053 = vmatprep.subr.bf16.mxu0 0
          %1054 = vmatpush1.bf16.msra.mxu0 %v985
          %1055 = vmatprep.subr.bf16.mxu0 0
          %1056 = vmatpush1.bf16.msra.mxu0 %v986
          %1057 = vmatprep.subr.bf16.mxu0 0
          %1058 = vmatpush1.bf16.msra.mxu0 %v987
          %1059 = vmatprep.subr.bf16.mxu0 0
          %1060 = vmatpush1.bf16.msra.mxu0 %v988
          %1061 = vmatprep.subr.bf16.mxu0 0
          %1062 = vmatpush1.bf16.msra.mxu0 %v989
          %1063 = vmatprep.subr.bf16.mxu0 0
          %1064 = vmatpush1.bf16.msra.mxu0 %v990
          %1065 = vmatprep.subr.bf16.mxu0 0
          %1066 = vmatpush1.bf16.msra.mxu0 %v991
          %1067 = vmatprep.subr.bf16.mxu0 0
          %1068 = vmatpush1.bf16.msra.mxu0 %v992
          %1069 = vmatprep.subr.bf16.mxu0 0
          %1070 = vmatpush1.bf16.msra.mxu0 %v993
          %1071 = vmatprep.subr.bf16.mxu0 0
          %1072 = vmatpush1.bf16.msra.mxu0 %v994
          %1073 = vmatprep.subr.bf16.mxu0 0
          %1074 = vmatpush1.bf16.msra.mxu0 %v995
          %1075 = vmatprep.subr.bf16.mxu0 0
          %1076 = vmatpush1.bf16.msra.mxu0 %v996
          %1077 = vmatprep.mubr.bf16.mxu0 %v726
          %1078 = vmatmul.mubr.bf16.gmra.mrb[0].mxu0 %v725
          %v1079 = vpop.f32.mrb[0].mxu0
          %v1080 = vadd.f32 0.0, %v1079
          %v1081 = vpop.f32.mrb[0].mxu0
          %v1082 = vpop.f32.mrb[0].mxu0
          %v1083 = vadd.f32 0.0, %v1082
          %v1084 = vpop.f32.mrb[0].mxu0
          %1085 = vmatprep.mubr.bf16.mxu0 %v730
          %1086 = vmatmul.mubr.bf16.gmra.mrb[0].mxu0 %v729
          %v1087 = vpop.f32.mrb[0].mxu0
          %v1088 = vadd.f32 0.0, %v1087
          %v1089 = vpop.f32.mrb[0].mxu0
          %v1090 = vpop.f32.mrb[0].mxu0
          %v1091 = vadd.f32 0.0, %v1090
          %v1092 = vpop.f32.mrb[0].mxu0
          %1093 = vmatprep.mubr.bf16.mxu0 %v734
          %1094 = vmatmul.mubr.bf16.gmra.mrb[0].mxu0 %v733
          %v1095 = vpop.f32.mrb[0].mxu0
          %v1096 = vadd.f32 0.0, %v1095
          %v1097 = vpop.f32.mrb[0].mxu0
          %v1098 = vpop.f32.mrb[0].mxu0
          %v1099 = vadd.f32 0.0, %v1098
          %v1100 = vpop.f32.mrb[0].mxu0
          %1101 = vmatprep.mubr.bf16.mxu0 %v738
          %1102 = vmatmul.mubr.bf16.gmra.mrb[0].mxu0 %v737
          %v1103 = vpop.f32.mrb[0].mxu0
          %v1104 = vadd.f32 0.0, %v1103
          %v1105 = vpop.f32.mrb[0].mxu0
          %v1106 = vpop.f32.mrb[0].mxu0
          %v1107 = vadd.f32 0.0, %v1106
          %v1108 = vpop.f32.mrb[0].mxu0
          %1109 = vmatprep.mubr.bf16.mxu0 %v742
          %1110 = vmatmul.mubr.bf16.gmra.mrb[0].mxu0 %v741
          %v1111 = vpop.f32.mrb[0].mxu0
          %v1112 = vadd.f32 0.0, %v1111
          %v1113 = vpop.f32.mrb[0].mxu0
          %v1114 = vpop.f32.mrb[0].mxu0
          %v1115 = vadd.f32 0.0, %v1114
          %v1116 = vpop.f32.mrb[0].mxu0
          %1117 = vmatprep.mubr.bf16.mxu0 %v746
          %1118 = vmatmul.mubr.bf16.gmra.mrb[0].mxu0 %v745
          %v1119 = vpop.f32.mrb[0].mxu0
          %v1120 = vadd.f32 0.0, %v1119
          %v1121 = vpop.f32.mrb[0].mxu0
          %v1122 = vpop.f32.mrb[0].mxu0
          %v1123 = vadd.f32 0.0, %v1122
          %v1124 = vpop.f32.mrb[0].mxu0
          %1125 = vmatprep.mubr.bf16.mxu0 %v750
          %1126 = vmatmul.mubr.bf16.gmra.mrb[0].mxu0 %v749
          %v1127 = vpop.f32.mrb[0].mxu0
          %v1128 = vadd.f32 0.0, %v1127
          %v1129 = vpop.f32.mrb[0].mxu0
          %v1130 = vpop.f32.mrb[0].mxu0
          %v1131 = vadd.f32 0.0, %v1130
          %v1132 = vpop.f32.mrb[0].mxu0
          %1133 = vmatprep.mubr.bf16.mxu0 %v754
          %1134 = vmatmul.mubr.bf16.gmra.mrb[0].mxu0 %v753
          %v1135 = vpop.f32.mrb[0].mxu0
          %v1136 = vadd.f32 0.0, %v1135
          %v1137 = vpop.f32.mrb[0].mxu0
          %v1138 = vpop.f32.mrb[0].mxu0
          %v1139 = vadd.f32 0.0, %v1138
          %v1140 = vpop.f32.mrb[0].mxu0
          %1141 = vmatprep.mubr.bf16.mxu0 %v758
          %1142 = vmatmul.mubr.bf16.gmra.mrb[0].mxu0 %v757
          %v1143 = vpop.f32.mrb[0].mxu0
          %v1144 = vadd.f32 0.0, %v1143
          %v1145 = vpop.f32.mrb[0].mxu0
          %v1146 = vpop.f32.mrb[0].mxu0
          %v1147 = vadd.f32 0.0, %v1146
          %v1148 = vpop.f32.mrb[0].mxu0
          %1149 = vmatprep.mubr.bf16.mxu0 %v762
          %1150 = vmatmul.mubr.bf16.gmra.mrb[0].mxu0 %v761
          %v1151 = vpop.f32.mrb[0].mxu0
          %v1152 = vadd.f32 0.0, %v1151
          %v1153 = vpop.f32.mrb[0].mxu0
          %v1154 = vpop.f32.mrb[0].mxu0
          %v1155 = vadd.f32 0.0, %v1154
          %v1156 = vpop.f32.mrb[0].mxu0
          %1157 = vmatprep.mubr.bf16.mxu0 %v766
          %1158 = vmatmul.mubr.bf16.gmra.mrb[0].mxu0 %v765
          %v1159 = vpop.f32.mrb[0].mxu0
          %v1160 = vadd.f32 0.0, %v1159
          %v1161 = vpop.f32.mrb[0].mxu0
          %v1162 = vpop.f32.mrb[0].mxu0
          %v1163 = vadd.f32 0.0, %v1162
          %v1164 = vpop.f32.mrb[0].mxu0
          %1165 = vmatprep.mubr.bf16.mxu0 %v770
          %1166 = vmatmul.mubr.bf16.gmra.mrb[0].mxu0 %v769
          %v1167 = vpop.f32.mrb[0].mxu0
          %v1168 = vadd.f32 0.0, %v1167
          %v1169 = vpop.f32.mrb[0].mxu0
          %v1170 = vpop.f32.mrb[0].mxu0
          %v1171 = vadd.f32 0.0, %v1170
          %v1172 = vpop.f32.mrb[0].mxu0
          %1173 = vmatprep.mubr.bf16.mxu0 %v774
          %1174 = vmatmul.mubr.bf16.gmra.mrb[0].mxu0 %v773
          %v1175 = vpop.f32.mrb[0].mxu0
          %v1176 = vadd.f32 0.0, %v1175
          %v1177 = vpop.f32.mrb[0].mxu0
          %v1178 = vpop.f32.mrb[0].mxu0
          %v1179 = vadd.f32 0.0, %v1178
          %v1180 = vpop.f32.mrb[0].mxu0
          %1181 = vmatprep.mubr.bf16.mxu0 %v778
          %1182 = vmatmul.mubr.bf16.gmra.mrb[0].mxu0 %v777
          %v1183 = vpop.f32.mrb[0].mxu0
          %v1184 = vadd.f32 0.0, %v1183
          %v1185 = vpop.f32.mrb[0].mxu0
          %v1186 = vpop.f32.mrb[0].mxu0
          %v1187 = vadd.f32 0.0, %v1186
          %v1188 = vpop.f32.mrb[0].mxu0
          %1189 = vmatprep.mubr.bf16.mxu0 %v782
          %1190 = vmatmul.mubr.bf16.gmra.mrb[0].mxu0 %v781
          %v1191 = vpop.f32.mrb[0].mxu0
          %v1192 = vadd.f32 0.0, %v1191
          %v1193 = vpop.f32.mrb[0].mxu0
          %v1194 = vpop.f32.mrb[0].mxu0
          %v1195 = vadd.f32 0.0, %v1194
          %v1196 = vpop.f32.mrb[0].mxu0
          %1197 = vmatprep.mubr.bf16.mxu0 %v786
          %1198 = vmatmul.mubr.bf16.gmra.mrb[0].mxu0 %v785
          %v1199 = vpop.f32.mrb[0].mxu0
          %v1200 = vadd.f32 0.0, %v1199
          %v1201 = vpop.f32.mrb[0].mxu0
          %v1202 = vpop.f32.mrb[0].mxu0
          %v1203 = vadd.f32 0.0, %v1202
          %v1204 = vpop.f32.mrb[0].mxu0
          %1205 = vdwg.mxu0
          %1206 = vmatprep.subr.bf16.mxu0 0
          %1207 = vmatpush1.bf16.msra.mxu0 %v997
          %1208 = vmatprep.subr.bf16.mxu0 0
          %1209 = vmatpush1.bf16.msra.mxu0 %v998
          %1210 = vmatprep.subr.bf16.mxu0 0
          %1211 = vmatpush1.bf16.msra.mxu0 %v999
          %1212 = vmatprep.subr.bf16.mxu0 0
          %1213 = vmatpush1.bf16.msra.mxu0 %v1000
          %1214 = vmatprep.subr.bf16.mxu0 0
          %1215 = vmatpush1.bf16.msra.mxu0 %v1001
          %1216 = vmatprep.subr.bf16.mxu0 0
          %1217 = vmatpush1.bf16.msra.mxu0 %v1002
          %1218 = vmatprep.subr.bf16.mxu0 0
          %1219 = vmatpush1.bf16.msra.mxu0 %v1003
          %1220 = vmatprep.subr.bf16.mxu0 0
          %1221 = vmatpush1.bf16.msra.mxu0 %v1004
          %1222 = vmatprep.subr.bf16.mxu0 0
          %1223 = vmatpush1.bf16.msra.mxu0 %v1005
          %1224 = vmatprep.subr.bf16.mxu0 0
          %1225 = vmatpush1.bf16.msra.mxu0 %v1006
          %1226 = vmatprep.subr.bf16.mxu0 0
          %1227 = vmatpush1.bf16.msra.mxu0 %v1007
          %1228 = vmatprep.subr.bf16.mxu0 0
          %1229 = vmatpush1.bf16.msra.mxu0 %v1008
          %1230 = vmatprep.subr.bf16.mxu0 0
          %1231 = vmatpush1.bf16.msra.mxu0 %v1009
          %1232 = vmatprep.subr.bf16.mxu0 0
          %1233 = vmatpush1.bf16.msra.mxu0 %v1010
          %1234 = vmatprep.subr.bf16.mxu0 0
          %1235 = vmatpush1.bf16.msra.mxu0 %v1011
          %1236 = vmatprep.subr.bf16.mxu0 0
          %1237 = vmatpush1.bf16.msra.mxu0 %v1012
          %1238 = vmatprep.mubr.bf16.mxu0 %v728
          %1239 = vmatmul.mubr.bf16.gmra.mrb[0].mxu0 %v727
          %v1240 = vpop.f32.mrb[0].mxu0
          %v1241 = vadd.f32 %v1080, %v1240
          %v1242 = vpop.f32.mrb[0].mxu0
          %v1243 = vpop.f32.mrb[0].mxu0
          %v1244 = vadd.f32 %v1083, %v1243
          %v1245 = vpop.f32.mrb[0].mxu0
          %1246 = vmatprep.mubr.bf16.mxu0 %v732
          %1247 = vmatmul.mubr.bf16.gmra.mrb[0].mxu0 %v731
          %v1248 = vpop.f32.mrb[0].mxu0
          %v1249 = vadd.f32 %v1088, %v1248
          %v1250 = vpop.f32.mrb[0].mxu0
          %v1251 = vpop.f32.mrb[0].mxu0
          %v1252 = vadd.f32 %v1091, %v1251
          %v1253 = vpop.f32.mrb[0].mxu0
          %1254 = vmatprep.mubr.bf16.mxu0 %v736
          %1255 = vmatmul.mubr.bf16.gmra.mrb[0].mxu0 %v735
          %v1256 = vpop.f32.mrb[0].mxu0
          %v1257 = vadd.f32 %v1096, %v1256
          %v1258 = vpop.f32.mrb[0].mxu0
          %v1259 = vpop.f32.mrb[0].mxu0
          %v1260 = vadd.f32 %v1099, %v1259
          %v1261 = vpop.f32.mrb[0].mxu0
          %1262 = vmatprep.mubr.bf16.mxu0 %v740
          %1263 = vmatmul.mubr.bf16.gmra.mrb[0].mxu0 %v739
          %v1264 = vpop.f32.mrb[0].mxu0
          %v1265 = vadd.f32 %v1104, %v1264
          %v1266 = vpop.f32.mrb[0].mxu0
          %v1267 = vpop.f32.mrb[0].mxu0
          %v1268 = vadd.f32 %v1107, %v1267
          %v1269 = vpop.f32.mrb[0].mxu0
          %1270 = vmatprep.mubr.bf16.mxu0 %v744
          %1271 = vmatmul.mubr.bf16.gmra.mrb[0].mxu0 %v743
          %v1272 = vpop.f32.mrb[0].mxu0
          %v1273 = vadd.f32 %v1112, %v1272
          %v1274 = vpop.f32.mrb[0].mxu0
          %v1275 = vpop.f32.mrb[0].mxu0
          %v1276 = vadd.f32 %v1115, %v1275
          %v1277 = vpop.f32.mrb[0].mxu0
          %1278 = vmatprep.mubr.bf16.mxu0 %v748
          %1279 = vmatmul.mubr.bf16.gmra.mrb[0].mxu0 %v747
          %v1280 = vpop.f32.mrb[0].mxu0
          %v1281 = vadd.f32 %v1120, %v1280
          %v1282 = vpop.f32.mrb[0].mxu0
          %v1283 = vpop.f32.mrb[0].mxu0
          %v1284 = vadd.f32 %v1123, %v1283
          %v1285 = vpop.f32.mrb[0].mxu0
          %1286 = vmatprep.mubr.bf16.mxu0 %v752
          %1287 = vmatmul.mubr.bf16.gmra.mrb[0].mxu0 %v751
          %v1288 = vpop.f32.mrb[0].mxu0
          %v1289 = vadd.f32 %v1128, %v1288
          %v1290 = vpop.f32.mrb[0].mxu0
          %v1291 = vpop.f32.mrb[0].mxu0
          %v1292 = vadd.f32 %v1131, %v1291
          %v1293 = vpop.f32.mrb[0].mxu0
          %1294 = vmatprep.mubr.bf16.mxu0 %v756
          %1295 = vmatmul.mubr.bf16.gmra.mrb[0].mxu0 %v755
          %v1296 = vpop.f32.mrb[0].mxu0
          %v1297 = vadd.f32 %v1136, %v1296
          %v1298 = vpop.f32.mrb[0].mxu0
          %v1299 = vpop.f32.mrb[0].mxu0
          %v1300 = vadd.f32 %v1139, %v1299
          %v1301 = vpop.f32.mrb[0].mxu0
          %1302 = vmatprep.mubr.bf16.mxu0 %v760
          %1303 = vmatmul.mubr.bf16.gmra.mrb[0].mxu0 %v759
          %v1304 = vpop.f32.mrb[0].mxu0
          %v1305 = vadd.f32 %v1144, %v1304
          %v1306 = vpop.f32.mrb[0].mxu0
          %v1307 = vpop.f32.mrb[0].mxu0
          %v1308 = vadd.f32 %v1147, %v1307
          %v1309 = vpop.f32.mrb[0].mxu0
          %1310 = vmatprep.mubr.bf16.mxu0 %v764
          %1311 = vmatmul.mubr.bf16.gmra.mrb[0].mxu0 %v763
          %v1312 = vpop.f32.mrb[0].mxu0
          %v1313 = vadd.f32 %v1152, %v1312
          %v1314 = vpop.f32.mrb[0].mxu0
          %v1315 = vpop.f32.mrb[0].mxu0
          %v1316 = vadd.f32 %v1155, %v1315
          %v1317 = vpop.f32.mrb[0].mxu0
          %1318 = vmatprep.mubr.bf16.mxu0 %v768
          %1319 = vmatmul.mubr.bf16.gmra.mrb[0].mxu0 %v767
          %v1320 = vpop.f32.mrb[0].mxu0
          %v1321 = vadd.f32 %v1160, %v1320
          %v1322 = vpop.f32.mrb[0].mxu0
          %v1323 = vpop.f32.mrb[0].mxu0
          %v1324 = vadd.f32 %v1163, %v1323
          %v1325 = vpop.f32.mrb[0].mxu0
          %1326 = vmatprep.mubr.bf16.mxu0 %v772
          %1327 = vmatmul.mubr.bf16.gmra.mrb[0].mxu0 %v771
          %v1328 = vpop.f32.mrb[0].mxu0
          %v1329 = vadd.f32 %v1168, %v1328
          %v1330 = vpop.f32.mrb[0].mxu0
          %v1331 = vpop.f32.mrb[0].mxu0
          %v1332 = vadd.f32 %v1171, %v1331
          %v1333 = vpop.f32.mrb[0].mxu0
          %1334 = vmatprep.mubr.bf16.mxu0 %v776
          %1335 = vmatmul.mubr.bf16.gmra.mrb[0].mxu0 %v775
          %v1336 = vpop.f32.mrb[0].mxu0
          %v1337 = vadd.f32 %v1176, %v1336
          %v1338 = vpop.f32.mrb[0].mxu0
          %v1339 = vpop.f32.mrb[0].mxu0
          %v1340 = vadd.f32 %v1179, %v1339
          %v1341 = vpop.f32.mrb[0].mxu0
          %1342 = vmatprep.mubr.bf16.mxu0 %v780
          %1343 = vmatmul.mubr.bf16.gmra.mrb[0].mxu0 %v779
          %v1344 = vpop.f32.mrb[0].mxu0
          %v1345 = vadd.f32 %v1184, %v1344
          %v1346 = vpop.f32.mrb[0].mxu0
          %v1347 = vpop.f32.mrb[0].mxu0
          %v1348 = vadd.f32 %v1187, %v1347
          %v1349 = vpop.f32.mrb[0].mxu0
          %1350 = vmatprep.mubr.bf16.mxu0 %v784
          %1351 = vmatmul.mubr.bf16.gmra.mrb[0].mxu0 %v783
          %v1352 = vpop.f32.mrb[0].mxu0
          %v1353 = vadd.f32 %v1192, %v1352
          %v1354 = vpop.f32.mrb[0].mxu0
          %v1355 = vpop.f32.mrb[0].mxu0
          %v1356 = vadd.f32 %v1195, %v1355
          %v1357 = vpop.f32.mrb[0].mxu0
          %1358 = vmatprep.mubr.bf16.mxu0 %v788
          %1359 = vmatmul.mubr.bf16.gmra.mrb[0].mxu0 %v787
          %v1360 = vpop.f32.mrb[0].mxu0
          %v1361 = vadd.f32 %v1200, %v1360
          %v1362 = vpop.f32.mrb[0].mxu0
          %v1363 = vpop.f32.mrb[0].mxu0
          %v1364 = vadd.f32 %v1203, %v1363
          %v1365 = vpop.f32.mrb[0].mxu0
          %1366 = vdwg.mxu0
          %v1367 = vadd.f32 %v437, %v1241
          %v1368 = vadd.f32 %v438, %v1244
          %v1369 = vadd.f32 %v439, %v1249
          %v1370 = vadd.f32 %v440, %v1252
          %v1371 = vadd.f32 %v441, %v1257
          %v1372 = vadd.f32 %v442, %v1260
          %v1373 = vadd.f32 %v443, %v1265
          %v1374 = vadd.f32 %v444, %v1268
          %v1375 = vadd.f32 %v445, %v1273
          %v1376 = vadd.f32 %v446, %v1276
          %v1377 = vadd.f32 %v447, %v1281
          %v1378 = vadd.f32 %v448, %v1284
          %v1379 = vadd.f32 %v449, %v1289
          %v1380 = vadd.f32 %v450, %v1292
          %v1381 = vadd.f32 %v451, %v1297
          %v1382 = vadd.f32 %v452, %v1300
          %v1383 = vadd.f32 %v453, %v1305
          %v1384 = vadd.f32 %v454, %v1308
          %v1385 = vadd.f32 %v455, %v1313
          %v1386 = vadd.f32 %v456, %v1316
          %v1387 = vadd.f32 %v457, %v1321
          %v1388 = vadd.f32 %v458, %v1324
          %v1389 = vadd.f32 %v459, %v1329
          %v1390 = vadd.f32 %v460, %v1332
          %v1391 = vadd.f32 %v461, %v1337
          %v1392 = vadd.f32 %v462, %v1340
          %v1393 = vadd.f32 %v463, %v1345
          %v1394 = vadd.f32 %v464, %v1348
          %v1395 = vadd.f32 %v465, %v1353
          %v1396 = vadd.f32 %v466, %v1356
          %v1397 = vadd.f32 %v467, %v1361
          %v1398 = vadd.f32 %v468, %v1364
          %1399 = vst [vmem:[#allocation2] sm:$0xff] %v1367
          %1400 = vst [vmem:[#allocation2 + $0x8] sm:$0xff] %v1368
          %1401 = vst [vmem:[#allocation2 + $0x10] sm:$0xff] %v1369
          %1402 = vst [vmem:[#allocation2 + $0x18] sm:$0xff] %v1370
          %1403 = vst [vmem:[#allocation2 + $0x20] sm:$0xff] %v1371
          %1404 = vst [vmem:[#allocation2 + $0x28] sm:$0xff] %v1372
          %1405 = vst [vmem:[#allocation2 + $0x30] sm:$0xff] %v1373
          %1406 = vst [vmem:[#allocation2 + $0x38] sm:$0xff] %v1374
          %1407 = vst [vmem:[#allocation2 + $0x40] sm:$0xff] %v1375
          %1408 = vst [vmem:[#allocation2 + $0x48] sm:$0xff] %v1376
          %1409 = vst [vmem:[#allocation2 + $0x50] sm:$0xff] %v1377
          %1410 = vst [vmem:[#allocation2 + $0x58] sm:$0xff] %v1378
          %1411 = vst [vmem:[#allocation2 + $0x60] sm:$0xff] %v1379
          %1412 = vst [vmem:[#allocation2 + $0x68] sm:$0xff] %v1380
          %1413 = vst [vmem:[#allocation2 + $0x70] sm:$0xff] %v1381
          %1414 = vst [vmem:[#allocation2 + $0x78] sm:$0xff] %v1382
          %1415 = vst [vmem:[#allocation2 + $0x80] sm:$0xff] %v1383
          %1416 = vst [vmem:[#allocation2 + $0x88] sm:$0xff] %v1384
          %1417 = vst [vmem:[#allocation2 + $0x90] sm:$0xff] %v1385
          %1418 = vst [vmem:[#allocation2 + $0x98] sm:$0xff] %v1386
          %1419 = vst [vmem:[#allocation2 + $0xa0] sm:$0xff] %v1387
          %1420 = vst [vmem:[#allocation2 + $0xa8] sm:$0xff] %v1388
          %1421 = vst [vmem:[#allocation2 + $0xb0] sm:$0xff] %v1389
          %1422 = vst [vmem:[#allocation2 + $0xb8] sm:$0xff] %v1390
          %1423 = vst [vmem:[#allocation2 + $0xc0] sm:$0xff] %v1391
          %1424 = vst [vmem:[#allocation2 + $0xc8] sm:$0xff] %v1392
          %1425 = vst [vmem:[#allocation2 + $0xd0] sm:$0xff] %v1393
          %1426 = vst [vmem:[#allocation2 + $0xd8] sm:$0xff] %v1394
          %1427 = vst [vmem:[#allocation2 + $0xe0] sm:$0xff] %v1395
          %1428 = vst [vmem:[#allocation2 + $0xe8] sm:$0xff] %v1396
          %1429 = vst [vmem:[#allocation2 + $0xf0] sm:$0xff] %v1397
          %1430 = vst [vmem:[#allocation2 + $0xf8] sm:$0xff] %v1398
        $region60: #{tpu_custom_call.1} parent=35 // pred_fallthru
          _
        %p1431 = scmp.eq.s32.totalorder %s35, 1
        // Predicated region
        $region61: #{tpu_custom_call.1} parent=35 // pred_check
          %p1432 = pneg %p1431
        $region62: #{tpu_custom_call.1} parent=35 // pred_check_branch
          %1434 = sbr.rel (%p1432) target = $region64
        $region63: #{tpu_custom_call.1} parent=35 // pred_region
          %v1435 = vld [vmem:[#allocation2] sm:$0xff]
          %v1436 = vld [vmem:[#allocation2 + $0x8] sm:$0xff]
          %v1437 = vld [vmem:[#allocation2 + $0x10] sm:$0xff]
          %v1438 = vld [vmem:[#allocation2 + $0x18] sm:$0xff]
          %v1439 = vld [vmem:[#allocation2 + $0x20] sm:$0xff]
          %v1440 = vld [vmem:[#allocation2 + $0x28] sm:$0xff]
          %v1441 = vld [vmem:[#allocation2 + $0x30] sm:$0xff]
          %v1442 = vld [vmem:[#allocation2 + $0x38] sm:$0xff]
          %v1443 = vld [vmem:[#allocation2 + $0x40] sm:$0xff]
          %v1444 = vld [vmem:[#allocation2 + $0x48] sm:$0xff]
          %v1445 = vld [vmem:[#allocation2 + $0x50] sm:$0xff]
          %v1446 = vld [vmem:[#allocation2 + $0x58] sm:$0xff]
          %v1447 = vld [vmem:[#allocation2 + $0x60] sm:$0xff]
          %v1448 = vld [vmem:[#allocation2 + $0x68] sm:$0xff]
          %v1449 = vld [vmem:[#allocation2 + $0x70] sm:$0xff]
          %v1450 = vld [vmem:[#allocation2 + $0x78] sm:$0xff]
          %v1451 = vld [vmem:[#allocation2 + $0x80] sm:$0xff]
          %v1452 = vld [vmem:[#allocation2 + $0x88] sm:$0xff]
          %v1453 = vld [vmem:[#allocation2 + $0x90] sm:$0xff]
          %v1454 = vld [vmem:[#allocation2 + $0x98] sm:$0xff]
          %v1455 = vld [vmem:[#allocation2 + $0xa0] sm:$0xff]
          %v1456 = vld [vmem:[#allocation2 + $0xa8] sm:$0xff]
          %v1457 = vld [vmem:[#allocation2 + $0xb0] sm:$0xff]
          %v1458 = vld [vmem:[#allocation2 + $0xb8] sm:$0xff]
          %v1459 = vld [vmem:[#allocation2 + $0xc0] sm:$0xff]
          %v1460 = vld [vmem:[#allocation2 + $0xc8] sm:$0xff]
          %v1461 = vld [vmem:[#allocation2 + $0xd0] sm:$0xff]
          %v1462 = vld [vmem:[#allocation2 + $0xd8] sm:$0xff]
          %v1463 = vld [vmem:[#allocation2 + $0xe0] sm:$0xff]
          %v1464 = vld [vmem:[#allocation2 + $0xe8] sm:$0xff]
          %v1465 = vld [vmem:[#allocation2 + $0xf0] sm:$0xff]
          %v1466 = vld [vmem:[#allocation2 + $0xf8] sm:$0xff]
          %v1467 = vpack.c.bf16 %v1436, %v1435
          %v1468 = vpack.c.bf16 %v1438, %v1437
          %v1469 = vpack.c.bf16 %v1440, %v1439
          %v1470 = vpack.c.bf16 %v1442, %v1441
          %v1471 = vpack.c.bf16 %v1444, %v1443
          %v1472 = vpack.c.bf16 %v1446, %v1445
          %v1473 = vpack.c.bf16 %v1448, %v1447
          %v1474 = vpack.c.bf16 %v1450, %v1449
          %v1475 = vpack.c.bf16 %v1452, %v1451
          %v1476 = vpack.c.bf16 %v1454, %v1453
          %v1477 = vpack.c.bf16 %v1456, %v1455
          %v1478 = vpack.c.bf16 %v1458, %v1457
          %v1479 = vpack.c.bf16 %v1460, %v1459
          %v1480 = vpack.c.bf16 %v1462, %v1461
          %v1481 = vpack.c.bf16 %v1464, %v1463
          %v1482 = vpack.c.bf16 %v1466, %v1465
          %v1483 = vld [vmem:[#allocation12] sm:$0xf]
          %v1484 = vld [vmem:[#allocation12 + $0x4] sm:$0xf]
          %v1485 = vld [vmem:[#allocation12 + $0x8] sm:$0xf]
          %v1486 = vld [vmem:[#allocation12 + $0xc] sm:$0xf]
          %v1487 = vld [vmem:[#allocation12 + $0x10] sm:$0xf]
          %v1488 = vld [vmem:[#allocation12 + $0x14] sm:$0xf]
          %v1489 = vld [vmem:[#allocation12 + $0x18] sm:$0xf]
          %v1490 = vld [vmem:[#allocation12 + $0x1c] sm:$0xf]
          %v1491 = vld [vmem:[#allocation12 + $0x20] sm:$0xf]
          %v1492 = vld [vmem:[#allocation12 + $0x24] sm:$0xf]
          %v1493 = vld [vmem:[#allocation12 + $0x28] sm:$0xf]
          %v1494 = vld [vmem:[#allocation12 + $0x2c] sm:$0xf]
          %v1495 = vld [vmem:[#allocation12 + $0x30] sm:$0xf]
          %v1496 = vld [vmem:[#allocation12 + $0x34] sm:$0xf]
          %v1497 = vld [vmem:[#allocation12 + $0x38] sm:$0xf]
          %v1498 = vld [vmem:[#allocation12 + $0x3c] sm:$0xf]
          %v1515 = vunpack.c.l.b16 %v1483
          %v1516 = vunpack.c.l.b16 %v1484
          %v1517 = vunpack.c.l.b16 %v1485
          %v1518 = vunpack.c.l.b16 %v1486
          %v1519 = vunpack.c.l.b16 %v1487
          %v1520 = vunpack.c.l.b16 %v1488
          %v1521 = vunpack.c.l.b16 %v1489
          %v1522 = vunpack.c.l.b16 %v1490
          %v1523 = vunpack.c.l.b16 %v1491
          %v1524 = vunpack.c.l.b16 %v1492
          %v1525 = vunpack.c.l.b16 %v1493
          %v1526 = vunpack.c.l.b16 %v1494
          %v1527 = vunpack.c.l.b16 %v1495
          %v1528 = vunpack.c.l.b16 %v1496
          %v1529 = vunpack.c.l.b16 %v1497
          %v1530 = vunpack.c.l.b16 %v1498
          %v1531 = vpack.c.b16 %v1516, %v1515
          %v1532 = vpack.c.b16 %v1518, %v1517
          %v1533 = vpack.c.b16 %v1520, %v1519
          %v1534 = vpack.c.b16 %v1522, %v1521
          %v1535 = vpack.c.b16 %v1524, %v1523
          %v1536 = vpack.c.b16 %v1526, %v1525
          %v1537 = vpack.c.b16 %v1528, %v1527
          %v1538 = vpack.c.b16 %v1530, %v1529
          %1547 = vmatprep.subr.bf16.mxu0 0
          %1548 = vmatpush1.bf16.msra.mxu0 %v1531
          %1549 = vmatprep.subr.bf16.mxu0 0
          %1550 = vmatpush1.bf16.msra.mxu0 %v1532
          %1551 = vmatprep.subr.bf16.mxu0 0
          %1552 = vmatpush1.bf16.msra.mxu0 %v1533
          %1553 = vmatprep.subr.bf16.mxu0 0
          %1554 = vmatpush1.bf16.msra.mxu0 %v1534
          %1555 = vmatprep.subr.bf16.mxu0 0
          %1556 = vmatpush1.bf16.msra.mxu0 %v1535
          %1557 = vmatprep.subr.bf16.mxu0 0
          %1558 = vmatpush1.bf16.msra.mxu0 %v1536
          %1559 = vmatprep.subr.bf16.mxu0 0
          %1560 = vmatpush1.bf16.msra.mxu0 %v1537
          %1561 = vmatprep.subr.bf16.mxu0 0
          %1562 = vmatpush1.bf16.msra.mxu0 %v1538
          %1563 = vmatprep.subr.bf16.mxu0 0
          %1564 = vmatpush1.bf16.msra.mxu0 0
          %1565 = vmatprep.subr.bf16.mxu0 0
          %1566 = vmatpush1.bf16.msra.mxu0 0
          %1567 = vmatprep.subr.bf16.mxu0 0
          %1568 = vmatpush1.bf16.msra.mxu0 0
          %1569 = vmatprep.subr.bf16.mxu0 0
          %1570 = vmatpush1.bf16.msra.mxu0 0
          %1571 = vmatprep.subr.bf16.mxu0 0
          %1572 = vmatpush1.bf16.msra.mxu0 0
          %1573 = vmatprep.subr.bf16.mxu0 0
          %1574 = vmatpush1.bf16.msra.mxu0 0
          %1575 = vmatprep.subr.bf16.mxu0 0
          %1576 = vmatpush1.bf16.msra.mxu0 0
          %1577 = vmatprep.subr.bf16.mxu0 0
          %1578 = vmatpush1.bf16.msra.mxu0 0
          %1579 = vmatprep.mubr.bf16.mxu0 0
          %1580 = vmatmul.mubr.bf16.gmra.mrb[0].mxu0 %v1467
          %v1581 = vpop.f32.mrb[0].mxu0
          %v1582 = vadd.f32 0.0, %v1581
          %v1583 = vpop.f32.mrb[0].mxu0
          %v1584 = vpop.f32.mrb[0].mxu0
          %v1585 = vadd.f32 0.0, %v1584
          %v1586 = vpop.f32.mrb[0].mxu0
          %1587 = vmatprep.mubr.bf16.mxu0 0
          %1588 = vmatmul.mubr.bf16.gmra.mrb[0].mxu0 %v1468
          %v1589 = vpop.f32.mrb[0].mxu0
          %v1590 = vadd.f32 0.0, %v1589
          %v1591 = vpop.f32.mrb[0].mxu0
          %v1592 = vpop.f32.mrb[0].mxu0
          %v1593 = vadd.f32 0.0, %v1592
          %v1594 = vpop.f32.mrb[0].mxu0
          %1595 = vmatprep.mubr.bf16.mxu0 0
          %1596 = vmatmul.mubr.bf16.gmra.mrb[0].mxu0 %v1469
          %v1597 = vpop.f32.mrb[0].mxu0
          %v1598 = vadd.f32 0.0, %v1597
          %v1599 = vpop.f32.mrb[0].mxu0
          %v1600 = vpop.f32.mrb[0].mxu0
          %v1601 = vadd.f32 0.0, %v1600
          %v1602 = vpop.f32.mrb[0].mxu0
          %1603 = vmatprep.mubr.bf16.mxu0 0
          %1604 = vmatmul.mubr.bf16.gmra.mrb[0].mxu0 %v1470
          %v1605 = vpop.f32.mrb[0].mxu0
          %v1606 = vadd.f32 0.0, %v1605
          %v1607 = vpop.f32.mrb[0].mxu0
          %v1608 = vpop.f32.mrb[0].mxu0
          %v1609 = vadd.f32 0.0, %v1608
          %v1610 = vpop.f32.mrb[0].mxu0
          %1611 = vmatprep.mubr.bf16.mxu0 0
          %1612 = vmatmul.mubr.bf16.gmra.mrb[0].mxu0 %v1471
          %v1613 = vpop.f32.mrb[0].mxu0
          %v1614 = vadd.f32 0.0, %v1613
          %v1615 = vpop.f32.mrb[0].mxu0
          %v1616 = vpop.f32.mrb[0].mxu0
          %v1617 = vadd.f32 0.0, %v1616
          %v1618 = vpop.f32.mrb[0].mxu0
          %1619 = vmatprep.mubr.bf16.mxu0 0
          %1620 = vmatmul.mubr.bf16.gmra.mrb[0].mxu0 %v1472
          %v1621 = vpop.f32.mrb[0].mxu0
          %v1622 = vadd.f32 0.0, %v1621
          %v1623 = vpop.f32.mrb[0].mxu0
          %v1624 = vpop.f32.mrb[0].mxu0
          %v1625 = vadd.f32 0.0, %v1624
          %v1626 = vpop.f32.mrb[0].mxu0
          %1627 = vmatprep.mubr.bf16.mxu0 0
          %1628 = vmatmul.mubr.bf16.gmra.mrb[0].mxu0 %v1473
          %v1629 = vpop.f32.mrb[0].mxu0
          %v1630 = vadd.f32 0.0, %v1629
          %v1631 = vpop.f32.mrb[0].mxu0
          %v1632 = vpop.f32.mrb[0].mxu0
          %v1633 = vadd.f32 0.0, %v1632
          %v1634 = vpop.f32.mrb[0].mxu0
          %1635 = vmatprep.mubr.bf16.mxu0 0
          %1636 = vmatmul.mubr.bf16.gmra.mrb[0].mxu0 %v1474
          %v1637 = vpop.f32.mrb[0].mxu0
          %v1638 = vadd.f32 0.0, %v1637
          %v1639 = vpop.f32.mrb[0].mxu0
          %v1640 = vpop.f32.mrb[0].mxu0
          %v1641 = vadd.f32 0.0, %v1640
          %v1642 = vpop.f32.mrb[0].mxu0
          %1643 = vmatprep.mubr.bf16.mxu0 0
          %1644 = vmatmul.mubr.bf16.gmra.mrb[0].mxu0 %v1475
          %v1645 = vpop.f32.mrb[0].mxu0
          %v1646 = vadd.f32 0.0, %v1645
          %v1647 = vpop.f32.mrb[0].mxu0
          %v1648 = vpop.f32.mrb[0].mxu0
          %v1649 = vadd.f32 0.0, %v1648
          %v1650 = vpop.f32.mrb[0].mxu0
          %1651 = vmatprep.mubr.bf16.mxu0 0
          %1652 = vmatmul.mubr.bf16.gmra.mrb[0].mxu0 %v1476
          %v1653 = vpop.f32.mrb[0].mxu0
          %v1654 = vadd.f32 0.0, %v1653
          %v1655 = vpop.f32.mrb[0].mxu0
          %v1656 = vpop.f32.mrb[0].mxu0
          %v1657 = vadd.f32 0.0, %v1656
          %v1658 = vpop.f32.mrb[0].mxu0
          %1659 = vmatprep.mubr.bf16.mxu0 0
          %1660 = vmatmul.mubr.bf16.gmra.mrb[0].mxu0 %v1477
          %v1661 = vpop.f32.mrb[0].mxu0
          %v1662 = vadd.f32 0.0, %v1661
          %v1663 = vpop.f32.mrb[0].mxu0
          %v1664 = vpop.f32.mrb[0].mxu0
          %v1665 = vadd.f32 0.0, %v1664
          %v1666 = vpop.f32.mrb[0].mxu0
          %1667 = vmatprep.mubr.bf16.mxu0 0
          %1668 = vmatmul.mubr.bf16.gmra.mrb[0].mxu0 %v1478
          %v1669 = vpop.f32.mrb[0].mxu0
          %v1670 = vadd.f32 0.0, %v1669
          %v1671 = vpop.f32.mrb[0].mxu0
          %v1672 = vpop.f32.mrb[0].mxu0
          %v1673 = vadd.f32 0.0, %v1672
          %v1674 = vpop.f32.mrb[0].mxu0
          %1675 = vmatprep.mubr.bf16.mxu0 0
          %1676 = vmatmul.mubr.bf16.gmra.mrb[0].mxu0 %v1479
          %v1677 = vpop.f32.mrb[0].mxu0
          %v1678 = vadd.f32 0.0, %v1677
          %v1679 = vpop.f32.mrb[0].mxu0
          %v1680 = vpop.f32.mrb[0].mxu0
          %v1681 = vadd.f32 0.0, %v1680
          %v1682 = vpop.f32.mrb[0].mxu0
          %1683 = vmatprep.mubr.bf16.mxu0 0
          %1684 = vmatmul.mubr.bf16.gmra.mrb[0].mxu0 %v1480
          %v1685 = vpop.f32.mrb[0].mxu0
          %v1686 = vadd.f32 0.0, %v1685
          %v1687 = vpop.f32.mrb[0].mxu0
          %v1688 = vpop.f32.mrb[0].mxu0
          %v1689 = vadd.f32 0.0, %v1688
          %v1690 = vpop.f32.mrb[0].mxu0
          %1691 = vmatprep.mubr.bf16.mxu0 0
          %1692 = vmatmul.mubr.bf16.gmra.mrb[0].mxu0 %v1481
          %v1693 = vpop.f32.mrb[0].mxu0
          %v1694 = vadd.f32 0.0, %v1693
          %v1695 = vpop.f32.mrb[0].mxu0
          %v1696 = vpop.f32.mrb[0].mxu0
          %v1697 = vadd.f32 0.0, %v1696
          %v1698 = vpop.f32.mrb[0].mxu0
          %1699 = vmatprep.mubr.bf16.mxu0 0
          %1700 = vmatmul.mubr.bf16.gmra.mrb[0].mxu0 %v1482
          %v1701 = vpop.f32.mrb[0].mxu0
          %v1702 = vadd.f32 0.0, %v1701
          %v1703 = vpop.f32.mrb[0].mxu0
          %v1704 = vpop.f32.mrb[0].mxu0
          %v1705 = vadd.f32 0.0, %v1704
          %v1706 = vpop.f32.mrb[0].mxu0
          %1707 = vdwg.mxu0
          %v1708 = vmul.f32 %v1582, 0.9
          %v1709 = vmul.f32 %v1585, 0.9
          %v1710 = vmul.f32 %v1590, 0.9
          %v1711 = vmul.f32 %v1593, 0.9
          %v1712 = vmul.f32 %v1598, 0.9
          %v1713 = vmul.f32 %v1601, 0.9
          %v1714 = vmul.f32 %v1606, 0.9
          %v1715 = vmul.f32 %v1609, 0.9
          %v1716 = vmul.f32 %v1614, 0.9
          %v1717 = vmul.f32 %v1617, 0.9
          %v1718 = vmul.f32 %v1622, 0.9
          %v1719 = vmul.f32 %v1625, 0.9
          %v1720 = vmul.f32 %v1630, 0.9
          %v1721 = vmul.f32 %v1633, 0.9
          %v1722 = vmul.f32 %v1638, 0.9
          %v1723 = vmul.f32 %v1641, 0.9
          %v1724 = vmul.f32 %v1646, 0.9
          %v1725 = vmul.f32 %v1649, 0.9
          %v1726 = vmul.f32 %v1654, 0.9
          %v1727 = vmul.f32 %v1657, 0.9
          %v1728 = vmul.f32 %v1662, 0.9
          %v1729 = vmul.f32 %v1665, 0.9
          %v1730 = vmul.f32 %v1670, 0.9
          %v1731 = vmul.f32 %v1673, 0.9
          %v1732 = vmul.f32 %v1678, 0.9
          %v1733 = vmul.f32 %v1681, 0.9
          %v1734 = vmul.f32 %v1686, 0.9
          %v1735 = vmul.f32 %v1689, 0.9
          %v1736 = vmul.f32 %v1694, 0.9
          %v1737 = vmul.f32 %v1697, 0.9
          %v1738 = vmul.f32 %v1702, 0.9
          %v1739 = vmul.f32 %v1705, 0.9
          %v1740 = vld [vmem:[%s282] sm:$0xff]
          %v1741 = vld [vmem:[%s282 + $0x8] sm:$0xff]
          %v1742 = vld [vmem:[%s282 + $0x10] sm:$0xff]
          %v1743 = vld [vmem:[%s282 + $0x18] sm:$0xff]
          %v1744 = vld [vmem:[%s282 + $0x20] sm:$0xff]
          %v1745 = vld [vmem:[%s282 + $0x28] sm:$0xff]
          %v1746 = vld [vmem:[%s282 + $0x30] sm:$0xff]
          %v1747 = vld [vmem:[%s282 + $0x38] sm:$0xff]
          %v1748 = vld [vmem:[%s282 + $0x40] sm:$0xff]
          %v1749 = vld [vmem:[%s282 + $0x48] sm:$0xff]
          %v1750 = vld [vmem:[%s282 + $0x50] sm:$0xff]
          %v1751 = vld [vmem:[%s282 + $0x58] sm:$0xff]
          %v1752 = vld [vmem:[%s282 + $0x60] sm:$0xff]
          %v1753 = vld [vmem:[%s282 + $0x68] sm:$0xff]
          %v1754 = vld [vmem:[%s282 + $0x70] sm:$0xff]
          %v1755 = vld [vmem:[%s282 + $0x78] sm:$0xff]
          %v1756 = vld [vmem:[%s282 + $0x80] sm:$0xff]
          %v1757 = vld [vmem:[%s282 + $0x88] sm:$0xff]
          %v1758 = vld [vmem:[%s282 + $0x90] sm:$0xff]
          %v1759 = vld [vmem:[%s282 + $0x98] sm:$0xff]
          %v1760 = vld [vmem:[%s282 + $0xa0] sm:$0xff]
          %v1761 = vld [vmem:[%s282 + $0xa8] sm:$0xff]
          %v1762 = vld [vmem:[%s282 + $0xb0] sm:$0xff]
          %v1763 = vld [vmem:[%s282 + $0xb8] sm:$0xff]
          %v1764 = vld [vmem:[%s282 + $0xc0] sm:$0xff]
          %v1765 = vld [vmem:[%s282 + $0xc8] sm:$0xff]
          %v1766 = vld [vmem:[%s282 + $0xd0] sm:$0xff]
          %v1767 = vld [vmem:[%s282 + $0xd8] sm:$0xff]
          %v1768 = vld [vmem:[%s282 + $0xe0] sm:$0xff]
          %v1769 = vld [vmem:[%s282 + $0xe8] sm:$0xff]
          %v1770 = vld [vmem:[%s282 + $0xf0] sm:$0xff]
          %v1771 = vld [vmem:[%s282 + $0xf8] sm:$0xff]
          %v1772 = vadd.f32 %v1708, %v1740
          %v1773 = vadd.f32 %v1709, %v1741
          %v1774 = vadd.f32 %v1710, %v1742
          %v1775 = vadd.f32 %v1711, %v1743
          %v1776 = vadd.f32 %v1712, %v1744
          %v1777 = vadd.f32 %v1713, %v1745
          %v1778 = vadd.f32 %v1714, %v1746
          %v1779 = vadd.f32 %v1715, %v1747
          %v1780 = vadd.f32 %v1716, %v1748
          %v1781 = vadd.f32 %v1717, %v1749
          %v1782 = vadd.f32 %v1718, %v1750
          %v1783 = vadd.f32 %v1719, %v1751
          %v1784 = vadd.f32 %v1720, %v1752
          %v1785 = vadd.f32 %v1721, %v1753
          %v1786 = vadd.f32 %v1722, %v1754
          %v1787 = vadd.f32 %v1723, %v1755
          %v1788 = vadd.f32 %v1724, %v1756
          %v1789 = vadd.f32 %v1725, %v1757
          %v1790 = vadd.f32 %v1726, %v1758
          %v1791 = vadd.f32 %v1727, %v1759
          %v1792 = vadd.f32 %v1728, %v1760
          %v1793 = vadd.f32 %v1729, %v1761
          %v1794 = vadd.f32 %v1730, %v1762
          %v1795 = vadd.f32 %v1731, %v1763
          %v1796 = vadd.f32 %v1732, %v1764
          %v1797 = vadd.f32 %v1733, %v1765
          %v1798 = vadd.f32 %v1734, %v1766
          %v1799 = vadd.f32 %v1735, %v1767
          %v1800 = vadd.f32 %v1736, %v1768
          %v1801 = vadd.f32 %v1737, %v1769
          %v1802 = vadd.f32 %v1738, %v1770
          %v1803 = vadd.f32 %v1739, %v1771
          %1804 = vst [vmem:[%s315] sm:$0xff] %v1772
          %1805 = vst [vmem:[%s315 + $0x8] sm:$0xff] %v1773
          %1806 = vst [vmem:[%s315 + $0x10] sm:$0xff] %v1774
          %1807 = vst [vmem:[%s315 + $0x18] sm:$0xff] %v1775
          %1808 = vst [vmem:[%s315 + $0x20] sm:$0xff] %v1776
          %1809 = vst [vmem:[%s315 + $0x28] sm:$0xff] %v1777
          %1810 = vst [vmem:[%s315 + $0x30] sm:$0xff] %v1778
          %1811 = vst [vmem:[%s315 + $0x38] sm:$0xff] %v1779
          %1812 = vst [vmem:[%s315 + $0x40] sm:$0xff] %v1780
          %1813 = vst [vmem:[%s315 + $0x48] sm:$0xff] %v1781
          %1814 = vst [vmem:[%s315 + $0x50] sm:$0xff] %v1782
          %1815 = vst [vmem:[%s315 + $0x58] sm:$0xff] %v1783
          %1816 = vst [vmem:[%s315 + $0x60] sm:$0xff] %v1784
          %1817 = vst [vmem:[%s315 + $0x68] sm:$0xff] %v1785
          %1818 = vst [vmem:[%s315 + $0x70] sm:$0xff] %v1786
          %1819 = vst [vmem:[%s315 + $0x78] sm:$0xff] %v1787
          %1820 = vst [vmem:[%s315 + $0x80] sm:$0xff] %v1788
          %1821 = vst [vmem:[%s315 + $0x88] sm:$0xff] %v1789
          %1822 = vst [vmem:[%s315 + $0x90] sm:$0xff] %v1790
          %1823 = vst [vmem:[%s315 + $0x98] sm:$0xff] %v1791
          %1824 = vst [vmem:[%s315 + $0xa0] sm:$0xff] %v1792
          %1825 = vst [vmem:[%s315 + $0xa8] sm:$0xff] %v1793
          %1826 = vst [vmem:[%s315 + $0xb0] sm:$0xff] %v1794
          %1827 = vst [vmem:[%s315 + $0xb8] sm:$0xff] %v1795
          %1828 = vst [vmem:[%s315 + $0xc0] sm:$0xff] %v1796
          %1829 = vst [vmem:[%s315 + $0xc8] sm:$0xff] %v1797
          %1830 = vst [vmem:[%s315 + $0xd0] sm:$0xff] %v1798
          %1831 = vst [vmem:[%s315 + $0xd8] sm:$0xff] %v1799
          %1832 = vst [vmem:[%s315 + $0xe0] sm:$0xff] %v1800
          %1833 = vst [vmem:[%s315 + $0xe8] sm:$0xff] %v1801
          %1834 = vst [vmem:[%s315 + $0xf0] sm:$0xff] %v1802
          %1835 = vst [vmem:[%s315 + $0xf8] sm:$0xff] %v1803
        $region64: #{tpu_custom_call.1} parent=35 // pred_fallthru
          _
        %s1836 = sand.u32 %s152, 1
        %s1837 = scalar_lea.sflag [#allocation8], %s1836
        %s1838 = sand.u32 %s152, 1
        %s1839 = smul.addr %s1838, 256
        %s1840 = scalar_lea.vmem [#allocation13], %s1839
        // Predicated region
        $region65: #{tpu_custom_call.1} parent=35 // pred_check
          %p1841 = pneg %p162
        $region66: #{tpu_custom_call.1} parent=35 // pred_check_branch
          %1843 = sbr.rel (%p1841) target = $region68
        $region67: #{tpu_custom_call.1} parent=35 // pred_region
          %s1844 = smul.u32 32, %s34
          %s1846 = ssub.s32 4096, 4096
          %1847 = vsyncadd %s1837, %s1846
          %s1848 = smul.addr %s1844, 128
          %s1849 = scalar_lea.hbm %s6, %s1848
          %s1850 = sshll.u32 %s1840, 4
          %s1851 = int_to_ptr.vmem [resolvable:$true] %s1850
          %1856 = dma.vmem_to_hbm [thread:$0]  %s1851, 4096, %s1849, %s1837, 128, 128, 8
        $region68: #{tpu_custom_call.1} parent=35 // pred_fallthru
          _
      $region36: #{tpu_custom_call.1} parent=5 // pred_fallthru
        _
      %p1857 = scmp.le.s32.totalorder 2, %s25
      // Predicated region
      $region69: #{tpu_custom_call.1} parent=5 // pred_check
        %p1858 = pneg %p1857
      $region70: #{tpu_custom_call.1} parent=5 // pred_check_branch
        %1860 = sbr.rel (%p1858) target = $region72
      $region71: #{tpu_custom_call.1} parent=5 // pred_region
        %s1861 = ssub.s32 %s25, 2
        // Predicated region
        $region73: #{tpu_custom_call.1} parent=71 // pred_check
          %p1862 = pneg %p168
        $region74: #{tpu_custom_call.1} parent=71 // pred_check_branch
          %1864 = sbr.rel (%p1862) target = $region76
        $region75: #{tpu_custom_call.1} parent=71 // pred_region
          %s1865 = sand.u32 %s153, 1
          %s1866 = scalar_lea.sflag [#allocation8], %s1865
          %s1867 = sand.u32 %s153, 1
          %s1868 = smul.addr %s1867, 256
          %s1869 = scalar_lea.vmem [#allocation13], %s1868
          %1870 = dma.done %s1866, 4096
        $region76: #{tpu_custom_call.1} parent=71 // pred_fallthru
          _
      $region72: #{tpu_custom_call.1} parent=5 // pred_fallthru
        _
    $region6: #{tpu_custom_call.1} parent=1 // loop_footer
      %s29 = sadd.s32 1, %s25
    $region7: #{tpu_custom_call.1} parent=1 // loop_footer_branch
      %24 = sbr.rel target = $region3
    $region8: #{tpu_custom_call.1} parent=1 // loop_exit
      _
    %1871 = vsyncpa [#allocation7], 1
    %s1872 = scalar_lea.sflag [#allocation7], 1
    %1873 = vsyncpa %s1872, 1
    %1874 = vsyncpa [#allocation10], 1
    %1875 = vsyncpa [#allocation8], 1
    %s1876 = scalar_lea.sflag [#allocation8], 1
    %1877 = vsyncpa %s1876, 1

</llo_original>
